<compile_context>
chip_gen: v7x
topology: tpu7x:2x2x1
jax: 0.10.0
libtpu: 0.0.40
codegen_flags: <defaults>
</compile_context>

<pallas_src>
import jax
import jax.numpy as jnp
from jax.experimental import pallas as pl
from jax.experimental.pallas import tpu as pltpu  # noqa: F401  (TPU backend)

_LANE = 128      # vreg lane width
_SUBLANE = 8     # vreg sublane count (f32)


def _round_up(x, m):
    return ((x + m - 1) // m) * m


def _pad2d(a, rows, cols):
    r, c = a.shape
    return jnp.pad(a, ((0, rows - r), (0, cols - c)))


# --------------------------------------------------------------------------
# Fused Pallas kernel: both graph encoders + shared MLP head, one invocation
# --------------------------------------------------------------------------
def fused_forward(counts, h_x, h_ea, h_ei, g_x, g_ea, g_ei,
                  w_in_s, b_in_s, w_msg_s, b_msg_s, w_edge_s, b_edge_s,
                  w1, b1, w2, b2):
    """counts = ((n_nodes_h, n_edges_h), (n_nodes_g, n_edges_g)) -- static ints."""
    hp = w1.shape[1]
    (n_h, e_h), (n_g, e_g) = counts

    def kernel(h_x_ref, h_ea_ref, h_ei_ref, g_x_ref, g_ea_ref, g_ei_ref,
               w_in_ref, b_in_ref, w_msg_ref, b_msg_ref,
               w_edge_ref, b_edge_ref,
               w1_ref, b1_ref, w2_ref, b2_ref, out_ref):

        contract0 = (((0,), (0,)), ((), ()))   # contract dim 0 of both operands

        def encode(g, n_nodes, n_edges, x_ref, ea_ref, ei_ref):
            x = x_ref[...]                      # (Np, F)
            ea = ea_ref[...]                    # (Ep, Fe)
            ei = ei_ref[...]                    # (2, Ep) int32
            np_ = x.shape[0]
            ep = ea.shape[0]

            # Node embedding: h = relu(X @ W_in + b_in)             (Np, Hp)
            h = jnp.maximum(
                jnp.dot(x, w_in_ref[g], preferred_element_type=jnp.float32)
                + b_in_ref[g], 0.0)

            # Per-edge sigmoid gate from edge attributes            (Ep, 1)
            logit = (jnp.sum(ea * w_edge_ref[g], axis=1, keepdims=True)
                     + b_edge_ref[g])
            gate = jax.nn.sigmoid(logit)
            if n_edges < ep:                    # mask padded edges (static cond)
                eidx = jax.lax.broadcasted_iota(jnp.int32, (ep, 1), 0)
                gate = jnp.where(eidx < n_edges, gate, 0.0)

            # One-hot src / dst matrices built from the edge list   (Np, Ep)
            niota = jax.lax.broadcasted_iota(jnp.int32, (np_, ep), 0)
            src_oh = (ei[0:1, :] == niota).astype(jnp.float32)
            dst_oh = (ei[1:2, :] == niota).astype(jnp.float32)

            # Gather h[src], gate, scatter-add to dst -- all on the MXU.
            gathered = jax.lax.dot_general(      # (Ep, Hp): h[src[e]]
                src_oh, h, contract0, preferred_element_type=jnp.float32)
            msg_e = gate * gathered              # (Ep, Hp)
            m = jnp.dot(dst_oh, msg_e,           # (Np, Hp): sum over incoming edges
                        preferred_element_type=jnp.float32)
            deg = jnp.dot(dst_oh, gate,          # (Np, 1): sum of gates per dst
                          preferred_element_type=jnp.float32)

            # Post-aggregation degree normalization (EUP reciprocal).
            m = m * pl.reciprocal(deg + 1.0, approx=True)

            # Message update + residual.
            h2 = jnp.maximum(
                h + jnp.dot(m, w_msg_ref[g], preferred_element_type=jnp.float32)
                + b_msg_ref[g], 0.0)             # (Np, Hp)

            # Masked mean pool as a matmul (guards n_nodes == 0).
            inv_n = 1.0 / float(max(n_nodes, 1))
            if n_nodes < np_:
                nidx = jax.lax.broadcasted_iota(jnp.int32, (1, np_), 1)
                mask_row = jnp.where(nidx < n_nodes, inv_n, 0.0)
            else:
                mask_row = jnp.full((1, np_), inv_n, jnp.float32)
            pooled = jnp.dot(mask_row, h2,
                             preferred_element_type=jnp.float32)    # (1, Hp)

            # Shared 2-layer MLP head (weights VMEM-resident, DMA'd once).
            h1 = jnp.maximum(
                jnp.dot(pooled, w1_ref[...], preferred_element_type=jnp.float32)
                + b1_ref[...], 0.0)
            z = (jnp.dot(h1, w2_ref[...], preferred_element_type=jnp.float32)
                 + b2_ref[...])                  # (1, Hp)

            out_ref[g] = z                       # lane-dense (1, Hp) store

        encode(0, n_h, e_h, h_x_ref, h_ea_ref, h_ei_ref)
        encode(1, n_g, e_g, g_x_ref, g_ea_ref, g_ei_ref)

    # Single invocation (no grid): every operand is small and lives whole in
    # VMEM; the shared head weights are loaded exactly once.
    return pl.pallas_call(
        kernel,
        out_shape=jax.ShapeDtypeStruct((2, 1, hp), jnp.float32),
    )(h_x, h_ea, h_ei, g_x, g_ea, g_ei,
      w_in_s, b_in_s, w_msg_s, b_msg_s, w_edge_s, b_edge_s, w1, b1, w2, b2)


# --------------------------------------------------------------------------
# Model: deterministic parameter init + forward
# --------------------------------------------------------------------------
class HeteroCrystalCLPallas:
    def __init__(self, num_node_features, num_edge_features, hidden_channels, key):
        ks = jax.random.split(key, 12)
        s = 0.1
        H = hidden_channels
        F, Fe = num_node_features, num_edge_features
        self.H = H
        self.Hp = _round_up(H, _LANE)
        Hp = self.Hp

        def lin(k, fin, fout):
            return s * jax.random.normal(k, (fin, fout), jnp.float32)

        # HeteroEncoder params
        h_w_in = lin(ks[0], F, H); h_b_in = jnp.zeros((1, H), jnp.float32)
        h_w_msg = lin(ks[1], H, H); h_b_msg = jnp.zeros((1, H), jnp.float32)
        h_w_edge = s * jax.random.normal(ks[2], (1, Fe), jnp.float32)
        h_b_edge = jnp.zeros((1, 1), jnp.float32)
        # CrystalGraphEncoder params
        g_w_in = lin(ks[3], F, H); g_b_in = jnp.zeros((1, H), jnp.float32)
        g_w_msg = lin(ks[4], H, H); g_b_msg = jnp.zeros((1, H), jnp.float32)
        g_w_edge = s * jax.random.normal(ks[5], (1, Fe), jnp.float32)
        g_b_edge = jnp.zeros((1, 1), jnp.float32)
        # shared ffw head (hidden -> hidden)
        f_w1 = lin(ks[6], H, H); f_b1 = jnp.zeros((1, H), jnp.float32)
        f_w2 = lin(ks[7], H, H); f_b2 = jnp.zeros((1, H), jnp.float32)

        # One-time init-side padding: only the hidden (lane) axis is padded to
        # 128 for lane-dense matmuls/stores.  Feature axes stay at F / Fe.
        self.w_in_s = jnp.stack([_pad2d(h_w_in, F, Hp), _pad2d(g_w_in, F, Hp)])
        self.b_in_s = jnp.stack([_pad2d(h_b_in, 1, Hp), _pad2d(g_b_in, 1, Hp)])
        self.w_msg_s = jnp.stack([_pad2d(h_w_msg, Hp, Hp), _pad2d(g_w_msg, Hp, Hp)])
        self.b_msg_s = jnp.stack([_pad2d(h_b_msg, 1, Hp), _pad2d(g_b_msg, 1, Hp)])
        self.w_edge_s = jnp.stack([h_w_edge, g_w_edge])       # (2, 1, Fe)
        self.b_edge_s = jnp.stack([h_b_edge, g_b_edge])       # (2, 1, 1)
        self.f_w1_p = _pad2d(f_w1, Hp, Hp)
        self.f_b1_p = _pad2d(f_b1, 1, Hp)
        self.f_w2_p = _pad2d(f_w2, Hp, Hp)
        self.f_b2_p = _pad2d(f_b2, 1, Hp)

    def __call__(self, hetero_data, graph_data):
        hx, h_ei, h_ea = hetero_data
        gx, g_ei, g_ea = graph_data
        H = self.H

        n_h, n_g = int(hx.shape[0]), int(gx.shape[0])
        e_h, e_g = int(h_ei.shape[1]), int(g_ei.shape[1])
        np_h = max(_round_up(n_h, _SUBLANE), _SUBLANE)
        np_g = max(_round_up(n_g, _SUBLANE), _SUBLANE)
        ep_h = max(_round_up(e_h, _SUBLANE), _SUBLANE)
        ep_g = max(_round_up(e_g, _SUBLANE), _SUBLANE)

        def pad_ax(a, ax, size):                 # no-op when already aligned
            if a.shape[ax] == size:
                return a
            pads = [(0, 0)] * a.ndim
            pads[ax] = (0, size - a.shape[ax])
            return jnp.pad(a, pads)

        hx_p = pad_ax(hx.astype(jnp.float32), 0, np_h)
        gx_p = pad_ax(gx.astype(jnp.float32), 0, np_g)
        h_ea_p = pad_ax(h_ea.astype(jnp.float32), 0, ep_h)
        g_ea_p = pad_ax(g_ea.astype(jnp.float32), 0, ep_g)
        h_ei_p = pad_ax(h_ei.astype(jnp.int32), 1, ep_h)
        g_ei_p = pad_ax(g_ei.astype(jnp.int32), 1, ep_g)

        out = fused_forward(((n_h, e_h), (n_g, e_g)),
                            hx_p, h_ea_p, h_ei_p, gx_p, g_ea_p, g_ei_p,
                            self.w_in_s, self.b_in_s,
                            self.w_msg_s, self.b_msg_s,
                            self.w_edge_s, self.b_edge_s,
                            self.f_w1_p, self.f_b1_p,
                            self.f_w2_p, self.f_b2_p)        # (2, 1, Hp)

        hetero_z = out[0, :, :H]
        graph_z = out[1, :, :H]
        return hetero_z, graph_z


# --------------------------------------------------------------------------
# Demo
# --------------------------------------------------------------------------
if __name__ == "__main__":
    key = jax.random.PRNGKey(0)
    k_data, k_model = jax.random.split(key)

    num_node_features = 8
    num_edge_features = 4
    hidden_channels = 32
    n_hetero_nodes, n_hetero_edges = 16, 48
    n_graph_nodes, n_graph_edges = 16, 40

    kd = jax.random.split(k_data, 6)
    hetero_x = jax.random.normal(kd[0], (n_hetero_nodes, num_node_features),
                                 jnp.float32)
    hetero_ei = jax.random.randint(kd[1], (2, n_hetero_edges), 0, n_hetero_nodes)
    hetero_ea = jax.random.normal(kd[2], (n_hetero_edges, num_edge_features),
                                  jnp.float32)

    graph_x = jax.random.normal(kd[3], (n_graph_nodes, num_node_features),
                                jnp.float32)
    graph_ei = jax.random.randint(kd[4], (2, n_graph_edges), 0, n_graph_nodes)
    graph_ea = jax.random.normal(kd[5], (n_graph_edges, num_edge_features),
                                 jnp.float32)

    model = HeteroCrystalCLPallas(num_node_features, num_edge_features,
                                  hidden_channels, k_model)

    hetero_z, graph_z = model((hetero_x, hetero_ei, hetero_ea),
                              (graph_x, graph_ei, graph_ea))
    jax.block_until_ready((hetero_z, graph_z))

    assert hetero_z.shape == (1, hidden_channels)
    assert graph_z.shape == (1, hidden_channels)
    assert hetero_z.dtype == jnp.float32 and graph_z.dtype == jnp.float32
    assert bool(jnp.all(jnp.isfinite(hetero_z))) and bool(jnp.all(jnp.isfinite(graph_z)))
    print("KERNEL_OK")
</pallas_src>

<mosaic_0001>
module attributes {stable_mosaic.version = 11 : i64} {
  func.func @kernel(%arg0: memref<16x8xf32, #tpu.memory_space<vmem>>, %arg1: memref<48x4xf32, #tpu.memory_space<vmem>>, %arg2: memref<2x48xi32, #tpu.memory_space<vmem>>, %arg3: memref<16x8xf32, #tpu.memory_space<vmem>>, %arg4: memref<40x4xf32, #tpu.memory_space<vmem>>, %arg5: memref<2x40xi32, #tpu.memory_space<vmem>>, %arg6: memref<2x8x128xf32, #tpu.memory_space<vmem>>, %arg7: memref<2x1x128xf32, #tpu.memory_space<vmem>>, %arg8: memref<2x128x128xf32, #tpu.memory_space<vmem>>, %arg9: memref<2x1x128xf32, #tpu.memory_space<vmem>>, %arg10: memref<2x1x4xf32, #tpu.memory_space<vmem>>, %arg11: memref<2x1x1xf32, #tpu.memory_space<vmem>>, %arg12: memref<128x128xf32, #tpu.memory_space<vmem>>, %arg13: memref<1x128xf32, #tpu.memory_space<vmem>>, %arg14: memref<128x128xf32, #tpu.memory_space<vmem>>, %arg15: memref<1x128xf32, #tpu.memory_space<vmem>>, %arg16: memref<2x1x128xf32, #tpu.memory_space<vmem>>) attributes {dimension_semantics = [], scalar_prefetch = 0 : i64, scratch_operands = 0 : i64, tpu.core_type = #tpu.core_type<tc>} {
    %c0 = arith.constant 0 : index
    %c0_0 = arith.constant 0 : index
    %0 = vector.load %arg0[%c0, %c0_0] : memref<16x8xf32, #tpu.memory_space<vmem>>, vector<16x8xf32>
    %c0_1 = arith.constant 0 : index
    %c0_2 = arith.constant 0 : index
    %1 = vector.load %arg1[%c0_1, %c0_2] : memref<48x4xf32, #tpu.memory_space<vmem>>, vector<48x4xf32>
    %c0_3 = arith.constant 0 : index
    %c0_4 = arith.constant 0 : index
    %2 = vector.load %arg2[%c0_3, %c0_4] : memref<2x48xi32, #tpu.memory_space<vmem>>, vector<2x48xi32>
    %c0_5 = arith.constant 0 : index
    %c0_6 = arith.constant 0 : index
    %c0_7 = arith.constant 0 : index
    %3 = vector.load %arg6[%c0_5, %c0_6, %c0_7] : memref<2x8x128xf32, #tpu.memory_space<vmem>>, vector<1x8x128xf32>
    %4 = vector.shape_cast %3 : vector<1x8x128xf32> to vector<8x128xf32>
    %cst = arith.constant dense<0.000000e+00> : vector<16x128xf32>
    %5 = tpu.matmul %0, %4, %cst {dimension_numbers = #tpu.dot_dimension_numbers<[1], [0], [0], [1], [0, 0, 1, 1], [], []>} : vector<16x8xf32>, vector<8x128xf32>, vector<16x128xf32> -> vector<16x128xf32>
    %c0_8 = arith.constant 0 : index
    %c0_9 = arith.constant 0 : index
    %c0_10 = arith.constant 0 : index
    %6 = vector.load %arg7[%c0_8, %c0_9, %c0_10] : memref<2x1x128xf32, #tpu.memory_space<vmem>>, vector<1x1x128xf32>
    %7 = vector.shape_cast %6 : vector<1x1x128xf32> to vector<1x128xf32>
    %8 = vector.broadcast %7 : vector<1x128xf32> to vector<16x128xf32>
    %9 = arith.addf %5, %8 : vector<16x128xf32>
    %cst_11 = arith.constant 0.000000e+00 : f32
    %10 = vector.broadcast %cst_11 : f32 to vector<16x128xf32>
    %11 = arith.maximumf %9, %10 : vector<16x128xf32>
    %c0_12 = arith.constant 0 : index
    %c0_13 = arith.constant 0 : index
    %c0_14 = arith.constant 0 : index
    %12 = vector.load %arg10[%c0_12, %c0_13, %c0_14] : memref<2x1x4xf32, #tpu.memory_space<vmem>>, vector<1x1x4xf32>
    %13 = vector.shape_cast %12 : vector<1x1x4xf32> to vector<1x4xf32>
    %14 = vector.broadcast %13 : vector<1x4xf32> to vector<48x4xf32>
    %15 = arith.mulf %1, %14 : vector<48x4xf32>
    %cst_15 = arith.constant dense<0.000000e+00> : vector<48xf32>
    %16 = vector.multi_reduction <add>, %15, %cst_15 [1] : vector<48x4xf32> to vector<48xf32>
    %17 = vector.shape_cast %16 : vector<48xf32> to vector<48x1xf32>
    %c0_16 = arith.constant 0 : index
    %c0_17 = arith.constant 0 : index
    %c0_18 = arith.constant 0 : index
    %18 = vector.load %arg11[%c0_16, %c0_17, %c0_18] : memref<2x1x1xf32, #tpu.memory_space<vmem>>, vector<1x1x1xf32>
    %19 = vector.shape_cast %18 : vector<1x1x1xf32> to vector<1x1xf32>
    %20 = vector.broadcast %19 : vector<1x1xf32> to vector<48x1xf32>
    %21 = arith.addf %17, %20 : vector<48x1xf32>
    %22 = arith.negf %21 : vector<48x1xf32>
    %23 = math.exp %22 : vector<48x1xf32>
    %cst_19 = arith.constant 1.000000e+00 : f32
    %24 = vector.broadcast %cst_19 : f32 to vector<48x1xf32>
    %25 = arith.addf %24, %23 : vector<48x1xf32>
    %26 = arith.divf %24, %25 : vector<48x1xf32>
    %27 = tpu.iota {dimensions = array<i32: 0>} : vector<16x48xi32>
    %28 = vector.extract_strided_slice %2 {offsets = [0, 0], sizes = [1, 48], strides = [1, 1]} : vector<2x48xi32> to vector<1x48xi32>
    %29 = vector.broadcast %28 : vector<1x48xi32> to vector<16x48xi32>
    %30 = arith.cmpi eq, %29, %27 : vector<16x48xi32>
    %31 = arith.extui %30 : vector<16x48xi1> to vector<16x48xi32>
    %32 = arith.sitofp %31 : vector<16x48xi32> to vector<16x48xf32>
    %33 = vector.extract_strided_slice %2 {offsets = [1, 0], sizes = [1, 48], strides = [1, 1]} : vector<2x48xi32> to vector<1x48xi32>
    %34 = vector.broadcast %33 : vector<1x48xi32> to vector<16x48xi32>
    %35 = arith.cmpi eq, %34, %27 : vector<16x48xi32>
    %36 = arith.extui %35 : vector<16x48xi1> to vector<16x48xi32>
    %37 = arith.sitofp %36 : vector<16x48xi32> to vector<16x48xf32>
    %cst_20 = arith.constant dense<0.000000e+00> : vector<48x128xf32>
    %38 = tpu.matmul %32, %11, %cst_20 {dimension_numbers = #tpu.dot_dimension_numbers<[0], [0], [1], [1], [0, 1, 1, 1], [], []>} : vector<16x48xf32>, vector<16x128xf32>, vector<48x128xf32> -> vector<48x128xf32>
    %39 = vector.broadcast %26 : vector<48x1xf32> to vector<48x128xf32>
    %40 = arith.mulf %39, %38 : vector<48x128xf32>
    %cst_21 = arith.constant dense<0.000000e+00> : vector<16x128xf32>
    %41 = tpu.matmul %37, %40, %cst_21 {dimension_numbers = #tpu.dot_dimension_numbers<[1], [0], [0], [1], [0, 0, 1, 1], [], []>} : vector<16x48xf32>, vector<48x128xf32>, vector<16x128xf32> -> vector<16x128xf32>
    %cst_22 = arith.constant dense<0.000000e+00> : vector<16x1xf32>
    %42 = tpu.matmul %37, %26, %cst_22 {dimension_numbers = #tpu.dot_dimension_numbers<[1], [0], [0], [1], [0, 0, 1, 1], [], []>} : vector<16x48xf32>, vector<48x1xf32>, vector<16x1xf32> -> vector<16x1xf32>
    %cst_23 = arith.constant 1.000000e+00 : f32
    %43 = vector.broadcast %cst_23 : f32 to vector<16x1xf32>
    %44 = arith.addf %42, %43 : vector<16x1xf32>
    %45 = tpu.reciprocal %44 {approx = true} : vector<16x1xf32> -> vector<16x1xf32>
    %46 = vector.broadcast %45 : vector<16x1xf32> to vector<16x128xf32>
    %47 = arith.mulf %41, %46 : vector<16x128xf32>
    %c0_24 = arith.constant 0 : index
    %c0_25 = arith.constant 0 : index
    %c0_26 = arith.constant 0 : index
    %48 = vector.load %arg8[%c0_24, %c0_25, %c0_26] : memref<2x128x128xf32, #tpu.memory_space<vmem>>, vector<1x128x128xf32>
    %49 = vector.shape_cast %48 : vector<1x128x128xf32> to vector<128x128xf32>
    %cst_27 = arith.constant dense<0.000000e+00> : vector<16x128xf32>
    %50 = tpu.matmul %47, %49, %cst_27 {dimension_numbers = #tpu.dot_dimension_numbers<[1], [0], [0], [1], [0, 0, 1, 1], [], []>} : vector<16x128xf32>, vector<128x128xf32>, vector<16x128xf32> -> vector<16x128xf32>
    %51 = arith.addf %11, %50 : vector<16x128xf32>
    %c0_28 = arith.constant 0 : index
    %c0_29 = arith.constant 0 : index
    %c0_30 = arith.constant 0 : index
    %52 = vector.load %arg9[%c0_28, %c0_29, %c0_30] : memref<2x1x128xf32, #tpu.memory_space<vmem>>, vector<1x1x128xf32>
    %53 = vector.shape_cast %52 : vector<1x1x128xf32> to vector<1x128xf32>
    %54 = vector.broadcast %53 : vector<1x128xf32> to vector<16x128xf32>
    %55 = arith.addf %51, %54 : vector<16x128xf32>
    %cst_31 = arith.constant 0.000000e+00 : f32
    %56 = vector.broadcast %cst_31 : f32 to vector<16x128xf32>
    %57 = arith.maximumf %55, %56 : vector<16x128xf32>
    %cst_32 = arith.constant 6.250000e-02 : f32
    %58 = vector.broadcast %cst_32 : f32 to vector<1x16xf32>
    %cst_33 = arith.constant dense<0.000000e+00> : vector<1x128xf32>
    %59 = tpu.matmul %58, %57, %cst_33 {dimension_numbers = #tpu.dot_dimension_numbers<[1], [0], [0], [1], [0, 0, 1, 1], [], []>} : vector<1x16xf32>, vector<16x128xf32>, vector<1x128xf32> -> vector<1x128xf32>
    %c0_34 = arith.constant 0 : index
    %c0_35 = arith.constant 0 : index
    %60 = vector.load %arg12[%c0_34, %c0_35] : memref<128x128xf32, #tpu.memory_space<vmem>>, vector<128x128xf32>
    %cst_36 = arith.constant dense<0.000000e+00> : vector<1x128xf32>
    %61 = tpu.matmul %59, %60, %cst_36 {dimension_numbers = #tpu.dot_dimension_numbers<[1], [0], [0], [1], [0, 0, 1, 1], [], []>} : vector<1x128xf32>, vector<128x128xf32>, vector<1x128xf32> -> vector<1x128xf32>
    %c0_37 = arith.constant 0 : index
    %c0_38 = arith.constant 0 : index
    %62 = vector.load %arg13[%c0_37, %c0_38] : memref<1x128xf32, #tpu.memory_space<vmem>>, vector<1x128xf32>
    %63 = arith.addf %61, %62 : vector<1x128xf32>
    %cst_39 = arith.constant 0.000000e+00 : f32
    %64 = vector.broadcast %cst_39 : f32 to vector<1x128xf32>
    %65 = arith.maximumf %63, %64 : vector<1x128xf32>
    %c0_40 = arith.constant 0 : index
    %c0_41 = arith.constant 0 : index
    %66 = vector.load %arg14[%c0_40, %c0_41] : memref<128x128xf32, #tpu.memory_space<vmem>>, vector<128x128xf32>
    %cst_42 = arith.constant dense<0.000000e+00> : vector<1x128xf32>
    %67 = tpu.matmul %65, %66, %cst_42 {dimension_numbers = #tpu.dot_dimension_numbers<[1], [0], [0], [1], [0, 0, 1, 1], [], []>} : vector<1x128xf32>, vector<128x128xf32>, vector<1x128xf32> -> vector<1x128xf32>
    %c0_43 = arith.constant 0 : index
    %c0_44 = arith.constant 0 : index
    %68 = vector.load %arg15[%c0_43, %c0_44] : memref<1x128xf32, #tpu.memory_space<vmem>>, vector<1x128xf32>
    %69 = arith.addf %67, %68 : vector<1x128xf32>
    %c0_45 = arith.constant 0 : index
    %c0_46 = arith.constant 0 : index
    %c0_47 = arith.constant 0 : index
    %70 = vector.load %arg16[%c0_45, %c0_46, %c0_47] : memref<2x1x128xf32, #tpu.memory_space<vmem>>, vector<1x1x128xf32>
    %71 = vector.shape_cast %70 : vector<1x1x128xf32> to vector<1x128xf32>
    %72 = vector.shape_cast %69 : vector<1x128xf32> to vector<1x1x128xf32>
    tpu.vector_store %arg16[%c0_45, %c0_46, %c0_47], %72 {strides = array<i32>} : memref<2x1x128xf32, #tpu.memory_space<vmem>>, vector<1x1x128xf32>,
    %c0_48 = arith.constant 0 : index
    %c0_49 = arith.constant 0 : index
    %73 = vector.load %arg3[%c0_48, %c0_49] : memref<16x8xf32, #tpu.memory_space<vmem>>, vector<16x8xf32>
    %c0_50 = arith.constant 0 : index
    %c0_51 = arith.constant 0 : index
    %74 = vector.load %arg4[%c0_50, %c0_51] : memref<40x4xf32, #tpu.memory_space<vmem>>, vector<40x4xf32>
    %c0_52 = arith.constant 0 : index
    %c0_53 = arith.constant 0 : index
    %75 = vector.load %arg5[%c0_52, %c0_53] : memref<2x40xi32, #tpu.memory_space<vmem>>, vector<2x40xi32>
    %c1 = arith.constant 1 : index
    %c0_54 = arith.constant 0 : index
    %c0_55 = arith.constant 0 : index
    %76 = vector.load %arg6[%c1, %c0_54, %c0_55] : memref<2x8x128xf32, #tpu.memory_space<vmem>>, vector<1x8x128xf32>
    %77 = vector.shape_cast %76 : vector<1x8x128xf32> to vector<8x128xf32>
    %cst_56 = arith.constant dense<0.000000e+00> : vector<16x128xf32>
    %78 = tpu.matmul %73, %77, %cst_56 {dimension_numbers = #tpu.dot_dimension_numbers<[1], [0], [0], [1], [0, 0, 1, 1], [], []>} : vector<16x8xf32>, vector<8x128xf32>, vector<16x128xf32> -> vector<16x128xf32>
    %c1_57 = arith.constant 1 : index
    %c0_58 = arith.constant 0 : index
    %c0_59 = arith.constant 0 : index
    %79 = vector.load %arg7[%c1_57, %c0_58, %c0_59] : memref<2x1x128xf32, #tpu.memory_space<vmem>>, vector<1x1x128xf32>
    %80 = vector.shape_cast %79 : vector<1x1x128xf32> to vector<1x128xf32>
    %81 = vector.broadcast %80 : vector<1x128xf32> to vector<16x128xf32>
    %82 = arith.addf %78, %81 : vector<16x128xf32>
    %cst_60 = arith.constant 0.000000e+00 : f32
    %83 = vector.broadcast %cst_60 : f32 to vector<16x128xf32>
    %84 = arith.maximumf %82, %83 : vector<16x128xf32>
    %c1_61 = arith.constant 1 : index
    %c0_62 = arith.constant 0 : index
    %c0_63 = arith.constant 0 : index
    %85 = vector.load %arg10[%c1_61, %c0_62, %c0_63] : memref<2x1x4xf32, #tpu.memory_space<vmem>>, vector<1x1x4xf32>
    %86 = vector.shape_cast %85 : vector<1x1x4xf32> to vector<1x4xf32>
    %87 = vector.broadcast %86 : vector<1x4xf32> to vector<40x4xf32>
    %88 = arith.mulf %74, %87 : vector<40x4xf32>
    %cst_64 = arith.constant dense<0.000000e+00> : vector<40xf32>
    %89 = vector.multi_reduction <add>, %88, %cst_64 [1] : vector<40x4xf32> to vector<40xf32>
    %90 = vector.shape_cast %89 : vector<40xf32> to vector<40x1xf32>
    %c1_65 = arith.constant 1 : index
    %c0_66 = arith.constant 0 : index
    %c0_67 = arith.constant 0 : index
    %91 = vector.load %arg11[%c1_65, %c0_66, %c0_67] : memref<2x1x1xf32, #tpu.memory_space<vmem>>, vector<1x1x1xf32>
    %92 = vector.shape_cast %91 : vector<1x1x1xf32> to vector<1x1xf32>
    %93 = vector.broadcast %92 : vector<1x1xf32> to vector<40x1xf32>
    %94 = arith.addf %90, %93 : vector<40x1xf32>
    %95 = arith.negf %94 : vector<40x1xf32>
    %96 = math.exp %95 : vector<40x1xf32>
    %cst_68 = arith.constant 1.000000e+00 : f32
    %97 = vector.broadcast %cst_68 : f32 to vector<40x1xf32>
    %98 = arith.addf %97, %96 : vector<40x1xf32>
    %99 = arith.divf %97, %98 : vector<40x1xf32>
    %100 = tpu.iota {dimensions = array<i32: 0>} : vector<16x40xi32>
    %101 = vector.extract_strided_slice %75 {offsets = [0, 0], sizes = [1, 40], strides = [1, 1]} : vector<2x40xi32> to vector<1x40xi32>
    %102 = vector.broadcast %101 : vector<1x40xi32> to vector<16x40xi32>
    %103 = arith.cmpi eq, %102, %100 : vector<16x40xi32>
    %104 = arith.extui %103 : vector<16x40xi1> to vector<16x40xi32>
    %105 = arith.sitofp %104 : vector<16x40xi32> to vector<16x40xf32>
    %106 = vector.extract_strided_slice %75 {offsets = [1, 0], sizes = [1, 40], strides = [1, 1]} : vector<2x40xi32> to vector<1x40xi32>
    %107 = vector.broadcast %106 : vector<1x40xi32> to vector<16x40xi32>
    %108 = arith.cmpi eq, %107, %100 : vector<16x40xi32>
    %109 = arith.extui %108 : vector<16x40xi1> to vector<16x40xi32>
    %110 = arith.sitofp %109 : vector<16x40xi32> to vector<16x40xf32>
    %cst_69 = arith.constant dense<0.000000e+00> : vector<40x128xf32>
    %111 = tpu.matmul %105, %84, %cst_69 {dimension_numbers = #tpu.dot_dimension_numbers<[0], [0], [1], [1], [0, 1, 1, 1], [], []>} : vector<16x40xf32>, vector<16x128xf32>, vector<40x128xf32> -> vector<40x128xf32>
    %112 = vector.broadcast %99 : vector<40x1xf32> to vector<40x128xf32>
    %113 = arith.mulf %112, %111 : vector<40x128xf32>
    %cst_70 = arith.constant dense<0.000000e+00> : vector<16x128xf32>
    %114 = tpu.matmul %110, %113, %cst_70 {dimension_numbers = #tpu.dot_dimension_numbers<[1], [0], [0], [1], [0, 0, 1, 1], [], []>} : vector<16x40xf32>, vector<40x128xf32>, vector<16x128xf32> -> vector<16x128xf32>
    %cst_71 = arith.constant dense<0.000000e+00> : vector<16x1xf32>
    %115 = tpu.matmul %110, %99, %cst_71 {dimension_numbers = #tpu.dot_dimension_numbers<[1], [0], [0], [1], [0, 0, 1, 1], [], []>} : vector<16x40xf32>, vector<40x1xf32>, vector<16x1xf32> -> vector<16x1xf32>
    %cst_72 = arith.constant 1.000000e+00 : f32
    %116 = vector.broadcast %cst_72 : f32 to vector<16x1xf32>
    %117 = arith.addf %115, %116 : vector<16x1xf32>
    %118 = tpu.reciprocal %117 {approx = true} : vector<16x1xf32> -> vector<16x1xf32>
    %119 = vector.broadcast %118 : vector<16x1xf32> to vector<16x128xf32>
    %120 = arith.mulf %114, %119 : vector<16x128xf32>
    %c1_73 = arith.constant 1 : index
    %c0_74 = arith.constant 0 : index
    %c0_75 = arith.constant 0 : index
    %121 = vector.load %arg8[%c1_73, %c0_74, %c0_75] : memref<2x128x128xf32, #tpu.memory_space<vmem>>, vector<1x128x128xf32>
    %122 = vector.shape_cast %121 : vector<1x128x128xf32> to vector<128x128xf32>
    %cst_76 = arith.constant dense<0.000000e+00> : vector<16x128xf32>
    %123 = tpu.matmul %120, %122, %cst_76 {dimension_numbers = #tpu.dot_dimension_numbers<[1], [0], [0], [1], [0, 0, 1, 1], [], []>} : vector<16x128xf32>, vector<128x128xf32>, vector<16x128xf32> -> vector<16x128xf32>
    %124 = arith.addf %84, %123 : vector<16x128xf32>
    %c1_77 = arith.constant 1 : index
    %c0_78 = arith.constant 0 : index
    %c0_79 = arith.constant 0 : index
    %125 = vector.load %arg9[%c1_77, %c0_78, %c0_79] : memref<2x1x128xf32, #tpu.memory_space<vmem>>, vector<1x1x128xf32>
    %126 = vector.shape_cast %125 : vector<1x1x128xf32> to vector<1x128xf32>
    %127 = vector.broadcast %126 : vector<1x128xf32> to vector<16x128xf32>
    %128 = arith.addf %124, %127 : vector<16x128xf32>
    %cst_80 = arith.constant 0.000000e+00 : f32
    %129 = vector.broadcast %cst_80 : f32 to vector<16x128xf32>
    %130 = arith.maximumf %128, %129 : vector<16x128xf32>
    %cst_81 = arith.constant 6.250000e-02 : f32
    %131 = vector.broadcast %cst_81 : f32 to vector<1x16xf32>
    %cst_82 = arith.constant dense<0.000000e+00> : vector<1x128xf32>
    %132 = tpu.matmul %131, %130, %cst_82 {dimension_numbers = #tpu.dot_dimension_numbers<[1], [0], [0], [1], [0, 0, 1, 1], [], []>} : vector<1x16xf32>, vector<16x128xf32>, vector<1x128xf32> -> vector<1x128xf32>
    %c0_83 = arith.constant 0 : index
    %c0_84 = arith.constant 0 : index
    %133 = vector.load %arg12[%c0_83, %c0_84] : memref<128x128xf32, #tpu.memory_space<vmem>>, vector<128x128xf32>
    %cst_85 = arith.constant dense<0.000000e+00> : vector<1x128xf32>
    %134 = tpu.matmul %132, %133, %cst_85 {dimension_numbers = #tpu.dot_dimension_numbers<[1], [0], [0], [1], [0, 0, 1, 1], [], []>} : vector<1x128xf32>, vector<128x128xf32>, vector<1x128xf32> -> vector<1x128xf32>
    %c0_86 = arith.constant 0 : index
    %c0_87 = arith.constant 0 : index
    %135 = vector.load %arg13[%c0_86, %c0_87] : memref<1x128xf32, #tpu.memory_space<vmem>>, vector<1x128xf32>
    %136 = arith.addf %134, %135 : vector<1x128xf32>
    %cst_88 = arith.constant 0.000000e+00 : f32
    %137 = vector.broadcast %cst_88 : f32 to vector<1x128xf32>
    %138 = arith.maximumf %136, %137 : vector<1x128xf32>
    %c0_89 = arith.constant 0 : index
    %c0_90 = arith.constant 0 : index
    %139 = vector.load %arg14[%c0_89, %c0_90] : memref<128x128xf32, #tpu.memory_space<vmem>>, vector<128x128xf32>
    %cst_91 = arith.constant dense<0.000000e+00> : vector<1x128xf32>
    %140 = tpu.matmul %138, %139, %cst_91 {dimension_numbers = #tpu.dot_dimension_numbers<[1], [0], [0], [1], [0, 0, 1, 1], [], []>} : vector<1x128xf32>, vector<128x128xf32>, vector<1x128xf32> -> vector<1x128xf32>
    %c0_92 = arith.constant 0 : index
    %c0_93 = arith.constant 0 : index
    %141 = vector.load %arg15[%c0_92, %c0_93] : memref<1x128xf32, #tpu.memory_space<vmem>>, vector<1x128xf32>
    %142 = arith.addf %140, %141 : vector<1x128xf32>
    %c1_94 = arith.constant 1 : index
    %c0_95 = arith.constant 0 : index
    %c0_96 = arith.constant 0 : index
    %143 = vector.load %arg16[%c1_94, %c0_95, %c0_96] : memref<2x1x128xf32, #tpu.memory_space<vmem>>, vector<1x1x128xf32>
    %144 = vector.shape_cast %143 : vector<1x1x128xf32> to vector<1x128xf32>
    %145 = vector.shape_cast %142 : vector<1x128xf32> to vector<1x1x128xf32>
    tpu.vector_store %arg16[%c1_94, %c0_95, %c0_96], %145 {strides = array<i32>} : memref<2x1x128xf32, #tpu.memory_space<vmem>>, vector<1x1x128xf32>,
    return
  }
}

</mosaic_0001>

<llo_original>
// kernel: tpu_custom_call.1
$region0: #{tpu_custom_call.1}
  #allocation0 [shape = 'u32[]', space=smem, size = 0x4, offset = 0x4, fixed_abs, tag = 'smem constant byte address 0x4 - core index']
  #allocation1 [shape = 'u32[144,128]{1,0:T(1,128)}', space=vmem, size = 0x12000, scoped, tag = 'internal scratch']
  %s0 = inlined_call_operand.vmem [shape: f32[16,8], index: 0, kind: input, shape index: {}]
  %s1 = inlined_call_operand.vmem [shape: f32[48,4], index: 1, kind: input, shape index: {}]
  %s2 = inlined_call_operand.vmem [shape: s32[2,48], index: 2, kind: input, shape index: {}]
  %s3 = inlined_call_operand.vmem [shape: f32[16,8], index: 3, kind: input, shape index: {}]
  %s4 = inlined_call_operand.vmem [shape: f32[40,4], index: 4, kind: input, shape index: {}]
  %s5 = inlined_call_operand.vmem [shape: s32[2,40], index: 5, kind: input, shape index: {}]
  %s6 = inlined_call_operand.vmem [shape: f32[2,8,128], index: 6, kind: input, shape index: {}]
  %s7 = inlined_call_operand.vmem [shape: f32[2,1,128], index: 7, kind: input, shape index: {}]
  %s8 = inlined_call_operand.hbm [shape: f32[2,128,128], index: 8, kind: input, shape index: {}]
  %s9 = inlined_call_operand.vmem [shape: f32[2,1,128], index: 9, kind: input, shape index: {}]
  %s10 = inlined_call_operand.vmem [shape: f32[2,1,4], index: 10, kind: input, shape index: {}]
  %s11 = inlined_call_operand.vmem [shape: f32[2,1,1], index: 11, kind: input, shape index: {}]
  %s12 = inlined_call_operand.vmem [shape: f32[128,128], index: 12, kind: input, shape index: {}]
  %s13 = inlined_call_operand.vmem [shape: f32[1,128], index: 13, kind: input, shape index: {}]
  %s14 = inlined_call_operand.hbm [shape: f32[128,128], index: 14, kind: input, shape index: {}]
  %s15 = inlined_call_operand.vmem [shape: f32[1,128], index: 15, kind: input, shape index: {}]
  %s16 = inlined_call_operand.hbm [shape: f32[2,1,128], index: 16, kind: output, shape index: {}]
  %s17 = sld [smem:[#allocation0]]
  $region82: #{tpu_custom_call.1} parent=0
    _
  %s19 = ssub.s32 1, %s17
  %s20 = scalar_select 0, %s19, %s17
  $region1: #{tpu_custom_call.1} parent=0
    #allocation2 [shape = 'u8[131072]{0}', space=vmem, size = 0x20000, scoped, tag = 'input window, operand 8, single buffered']
    #allocation3 [shape = 's32[1]{0}', space=sflag, size = 0x4, scoped, tag = 'scoped memory for tpu_custom_call.1']
    #allocation4 [shape = 's32[1]{0}', space=sflag, size = 0x4, scoped, tag = 'scoped memory for tpu_custom_call.1']
    #allocation5 [shape = 'u8[65536]{0}', space=vmem, size = 0x10000, scoped, tag = 'input window, operand 14, single buffered']
    #allocation6 [shape = 's32[1]{0}', space=sflag, size = 0x4, scoped, tag = 'scoped memory for tpu_custom_call.1']
    #allocation7 [shape = 'u8[1024]{0}', space=vmem, size = 0x400, scoped, tag = 'output window, operand 0, single buffered']
    %21 = vsyncpa [#allocation3], 0
    %22 = vsyncpa [#allocation6], 0
    %23 = vsyncpa [#allocation4], 0
    // Predicated region
    $region2: #{tpu_custom_call.1} parent=1 // pred_check
      _
    $region3: #{tpu_custom_call.1} parent=1 // pred_check_branch
      %25 = sbr.rel (0) target = $region5
    $region4: #{tpu_custom_call.1} parent=1 // pred_region
      _
    $region5: #{tpu_custom_call.1} parent=1 // pred_fallthru
      _
    // Predicated region
    $region6: #{tpu_custom_call.1} parent=1 // pred_check
      _
    $region7: #{tpu_custom_call.1} parent=1 // pred_check_branch
      %27 = sbr.rel (0) target = $region9
    $region8: #{tpu_custom_call.1} parent=1 // pred_region
      _
    $region9: #{tpu_custom_call.1} parent=1 // pred_fallthru
      _
    // Predicated region
    $region10: #{tpu_custom_call.1} parent=1 // pred_check
      _
    $region11: #{tpu_custom_call.1} parent=1 // pred_check_branch
      %29 = sbr.rel (0) target = $region13
    $region12: #{tpu_custom_call.1} parent=1 // pred_region
      _
    $region13: #{tpu_custom_call.1} parent=1 // pred_fallthru
      _
    // Predicated region
    $region14: #{tpu_custom_call.1} parent=1 // pred_check
      _
    $region15: #{tpu_custom_call.1} parent=1 // pred_check_branch
      %31 = sbr.rel (0) target = $region17
    $region16: #{tpu_custom_call.1} parent=1 // pred_region
      _
    $region17: #{tpu_custom_call.1} parent=1 // pred_fallthru
      _
    // Predicated region
    $region18: #{tpu_custom_call.1} parent=1 // pred_check
      _
    $region19: #{tpu_custom_call.1} parent=1 // pred_check_branch
      %33 = sbr.rel (0) target = $region21
    $region20: #{tpu_custom_call.1} parent=1 // pred_region
      _
    $region21: #{tpu_custom_call.1} parent=1 // pred_fallthru
      _
    // Predicated region
    $region22: #{tpu_custom_call.1} parent=1 // pred_check
      _
    $region23: #{tpu_custom_call.1} parent=1 // pred_check_branch
      %35 = sbr.rel (0) target = $region25
    $region24: #{tpu_custom_call.1} parent=1 // pred_region
      _
    $region25: #{tpu_custom_call.1} parent=1 // pred_fallthru
      _
    // Predicated region
    $region26: #{tpu_custom_call.1} parent=1 // pred_check
      _
    $region27: #{tpu_custom_call.1} parent=1 // pred_check_branch
      %37 = sbr.rel (0) target = $region29
    $region28: #{tpu_custom_call.1} parent=1 // pred_region
      _
    $region29: #{tpu_custom_call.1} parent=1 // pred_fallthru
      _
    // Predicated region
    $region30: #{tpu_custom_call.1} parent=1 // pred_check
      _
    $region31: #{tpu_custom_call.1} parent=1 // pred_check_branch
      %39 = sbr.rel (0) target = $region33
    $region32: #{tpu_custom_call.1} parent=1 // pred_region
      _
    $region33: #{tpu_custom_call.1} parent=1 // pred_fallthru
      _
    // Predicated region
    $region34: #{tpu_custom_call.1} parent=1 // pred_check
      _
    $region35: #{tpu_custom_call.1} parent=1 // pred_check_branch
      %41 = sbr.rel (0) target = $region37
    $region36: #{tpu_custom_call.1} parent=1 // pred_region
      %s43 = ssub.s32 4096, 4096
      %44 = vsyncadd [#allocation3], %s43
      %s45 = sshll.u32 [#allocation2], 4
      %s46 = int_to_ptr.vmem [resolvable:$true] %s45
      %51 = dma.hbm_to_vmem [thread:$0]  %s8, 4096, %s46, [#allocation3], 128, 128, 8
    $region37: #{tpu_custom_call.1} parent=1 // pred_fallthru
      _
    // Predicated region
    $region38: #{tpu_custom_call.1} parent=1 // pred_check
      _
    $region39: #{tpu_custom_call.1} parent=1 // pred_check_branch
      %53 = sbr.rel (0) target = $region41
    $region40: #{tpu_custom_call.1} parent=1 // pred_region
      _
    $region41: #{tpu_custom_call.1} parent=1 // pred_fallthru
      _
    // Predicated region
    $region42: #{tpu_custom_call.1} parent=1 // pred_check
      _
    $region43: #{tpu_custom_call.1} parent=1 // pred_check_branch
      %55 = sbr.rel (0) target = $region45
    $region44: #{tpu_custom_call.1} parent=1 // pred_region
      _
    $region45: #{tpu_custom_call.1} parent=1 // pred_fallthru
      _
    // Predicated region
    $region46: #{tpu_custom_call.1} parent=1 // pred_check
      _
    $region47: #{tpu_custom_call.1} parent=1 // pred_check_branch
      %57 = sbr.rel (0) target = $region49
    $region48: #{tpu_custom_call.1} parent=1 // pred_region
      _
    $region49: #{tpu_custom_call.1} parent=1 // pred_fallthru
      _
    // Predicated region
    $region50: #{tpu_custom_call.1} parent=1 // pred_check
      _
    $region51: #{tpu_custom_call.1} parent=1 // pred_check_branch
      %59 = sbr.rel (0) target = $region53
    $region52: #{tpu_custom_call.1} parent=1 // pred_region
      _
    $region53: #{tpu_custom_call.1} parent=1 // pred_fallthru
      _
    // Predicated region
    $region54: #{tpu_custom_call.1} parent=1 // pred_check
      _
    $region55: #{tpu_custom_call.1} parent=1 // pred_check_branch
      %61 = sbr.rel (0) target = $region57
    $region56: #{tpu_custom_call.1} parent=1 // pred_region
      _
    $region57: #{tpu_custom_call.1} parent=1 // pred_fallthru
      _
    // Predicated region
    $region58: #{tpu_custom_call.1} parent=1 // pred_check
      _
    $region59: #{tpu_custom_call.1} parent=1 // pred_check_branch
      %63 = sbr.rel (0) target = $region61
    $region60: #{tpu_custom_call.1} parent=1 // pred_region
      %s65 = ssub.s32 2048, 2048
      %66 = vsyncadd [#allocation6], %s65
      %s67 = sshll.u32 [#allocation5], 4
      %s68 = int_to_ptr.vmem [resolvable:$true] %s67
      %73 = dma.hbm_to_vmem [thread:$0]  %s14, 2048, %s68, [#allocation6], 128, 128, 8
    $region61: #{tpu_custom_call.1} parent=1 // pred_fallthru
      _
    // Predicated region
    $region62: #{tpu_custom_call.1} parent=1 // pred_check
      _
    $region63: #{tpu_custom_call.1} parent=1 // pred_check_branch
      %75 = sbr.rel (0) target = $region65
    $region64: #{tpu_custom_call.1} parent=1 // pred_region
      _
    $region65: #{tpu_custom_call.1} parent=1 // pred_fallthru
      _
    // Predicated region
    $region66: #{tpu_custom_call.1} parent=1 // pred_check
      _
    $region67: #{tpu_custom_call.1} parent=1 // pred_check_branch
      %77 = sbr.rel (0) target = $region69
    $region68: #{tpu_custom_call.1} parent=1 // pred_region
      %78 = dma.done [#allocation3], 4096
    $region69: #{tpu_custom_call.1} parent=1 // pred_fallthru
      _
    // Predicated region
    $region70: #{tpu_custom_call.1} parent=1 // pred_check
      _
    $region71: #{tpu_custom_call.1} parent=1 // pred_check_branch
      %80 = sbr.rel (0) target = $region73
    $region72: #{tpu_custom_call.1} parent=1 // pred_region
      %81 = dma.done [#allocation6], 2048
    $region73: #{tpu_custom_call.1} parent=1 // pred_fallthru
      _
    %v82 = vld [vmem:[%s0] sm:$0xff]
    %v83 = vld [vmem:[%s0 + $0x8] sm:$0xff]
    %v84 = vld [vmem:[%s1] sm:$0xff]
    %v85 = vld [vmem:[%s1 + $0x8] sm:$0xff]
    %v86 = vld [vmem:[%s1 + $0x10] sm:$0xff]
    %v87 = vld [vmem:[%s1 + $0x18] sm:$0xff]
    %v88 = vld [vmem:[%s1 + $0x20] sm:$0xff]
    %v89 = vld [vmem:[%s1 + $0x28] sm:$0xff]
    %v90 = vld [vmem:[%s2] sm:$0x3]
    %v91 = vld [vmem:[%s6] sm:$0xff]
    %v92 = vld [vmem:[%s7] sm:$0x1]
    %v94 = vlaneseq
    %v95 = vshrl.u32 %v94, 7
    %v96 = vsub.s32 0, %v95
    %v97 = vrot.slane %v92, %v96
    %vm99 = vcmask 64512
    %v101 = vsel %vm99, %v82, 0
    %v104 = vsel %vm99, %v83, 0
    %106 = vmatprep.subr.mxu0 0.0
    %107 = vmatpush1.msra.mxu0 %v91
    %108 = vmatprep.subr.mxu0 0.0
    %109 = vmatpush1.msra.mxu0 0.0
    %110 = vmatprep.subr.mxu0 0.0
    %111 = vmatpush1.msra.mxu0 0.0
    %112 = vmatprep.subr.mxu0 0.0
    %113 = vmatpush1.msra.mxu0 0.0
    %114 = vmatprep.subr.mxu0 0.0
    %115 = vmatpush1.msra.mxu0 0.0
    %116 = vmatprep.subr.mxu0 0.0
    %117 = vmatpush1.msra.mxu0 0.0
    %118 = vmatprep.subr.mxu0 0.0
    %119 = vmatpush1.msra.mxu0 0.0
    %120 = vmatprep.subr.mxu0 0.0
    %121 = vmatpush1.msra.mxu0 0.0
    %122 = vmatprep.subr.mxu0 0.0
    %123 = vmatpush1.msra.mxu0 0.0
    %124 = vmatprep.subr.mxu0 0.0
    %125 = vmatpush1.msra.mxu0 0.0
    %126 = vmatprep.subr.mxu0 0.0
    %127 = vmatpush1.msra.mxu0 0.0
    %128 = vmatprep.subr.mxu0 0.0
    %129 = vmatpush1.msra.mxu0 0.0
    %130 = vmatprep.subr.mxu0 0.0
    %131 = vmatpush1.msra.mxu0 0.0
    %132 = vmatprep.subr.mxu0 0.0
    %133 = vmatpush1.msra.mxu0 0.0
    %134 = vmatprep.subr.mxu0 0.0
    %135 = vmatpush1.msra.mxu0 0.0
    %136 = vmatprep.subr.mxu0 0.0
    %137 = vmatpush1.msra.mxu0 0.0
    %138 = vmatprep.subr.mxu0 0.0
    %139 = vmatpush1.msra.mxu0 0.0
    %140 = vmatprep.subr.mxu0 0.0
    %141 = vmatpush1.msra.mxu0 0.0
    %142 = vmatprep.subr.mxu0 0.0
    %143 = vmatpush1.msra.mxu0 0.0
    %144 = vmatprep.subr.mxu0 0.0
    %145 = vmatpush1.msra.mxu0 0.0
    %146 = vmatprep.subr.mxu0 0.0
    %147 = vmatpush1.msra.mxu0 0.0
    %148 = vmatprep.subr.mxu0 0.0
    %149 = vmatpush1.msra.mxu0 0.0
    %150 = vmatprep.subr.mxu0 0.0
    %151 = vmatpush1.msra.mxu0 0.0
    %152 = vmatprep.subr.mxu0 0.0
    %153 = vmatpush1.msra.mxu0 0.0
    %154 = vmatprep.subr.mxu0 0.0
    %155 = vmatpush1.msra.mxu0 0.0
    %156 = vmatprep.subr.mxu0 0.0
    %157 = vmatpush1.msra.mxu0 0.0
    %158 = vmatprep.subr.mxu0 0.0
    %159 = vmatpush1.msra.mxu0 0.0
    %160 = vmatprep.subr.mxu0 0.0
    %161 = vmatpush1.msra.mxu0 0.0
    %162 = vmatprep.subr.mxu0 0.0
    %163 = vmatpush1.msra.mxu0 0.0
    %164 = vmatprep.subr.mxu0 0.0
    %165 = vmatpush1.msra.mxu0 0.0
    %166 = vmatprep.subr.mxu0 0.0
    %167 = vmatpush1.msra.mxu0 0.0
    %168 = vmatprep.subr.mxu0 0.0
    %169 = vmatpush1.msra.mxu0 0.0
    %170 = vmatprep.mubr.f32.mxu0 0.0
    %171 = vmatmul.mubr.f32.gmra.mrb[0].mxu0 %v101
    %v172 = vpop.f32.mrb[0].mxu0
    %v173 = vadd.f32 %v97, %v172
    %v174 = vpop.f32.mrb[0].mxu0
    %175 = vmatprep.mubr.f32.mxu0 0.0
    %176 = vmatmul.mubr.f32.gmra.mrb[0].mxu0 %v104
    %v177 = vpop.f32.mrb[0].mxu0
    %v178 = vadd.f32 %v97, %v177
    %v179 = vpop.f32.mrb[0].mxu0
    %180 = vdwg.mxu0
    %v181 = vmax.f32 %v173, 0.0
    %v182 = vmax.f32 %v178, 0.0
    %v183 = vld [vmem:[%s10] sm:$0x1]
    %v185 = vlaneseq
    %v186 = vshrl.u32 %v185, 7
    %v187 = vsub.s32 0, %v186
    %v188 = vrot.slane %v183, %v187
    %v190 = vmul.f32 %v84, %v188
    %v191 = vmul.f32 %v85, %v188
    %v192 = vmul.f32 %v86, %v188
    %v193 = vmul.f32 %v87, %v188
    %v194 = vmul.f32 %v88, %v188
    %v195 = vmul.f32 %v89, %v188
    %vm196 = vcmask 31744
    %v197 = vsel %vm196, %v190, 0.0
    %198 = vadd.xlane.f32.xlu0 %v197
    %v199 = vpop.xlane.xlu0 %198
    %v200 = vsel %vm196, %v191, 0.0
    %201 = vadd.xlane.f32.xlu0 %v200
    %v202 = vpop.xlane.xlu0 %201
    %v203 = vsel %vm196, %v192, 0.0
    %204 = vadd.xlane.f32.xlu0 %v203
    %v205 = vpop.xlane.xlu0 %204
    %v206 = vsel %vm196, %v193, 0.0
    %207 = vadd.xlane.f32.xlu0 %v206
    %v208 = vpop.xlane.xlu0 %207
    %v209 = vsel %vm196, %v194, 0.0
    %210 = vadd.xlane.f32.xlu0 %v209
    %v211 = vpop.xlane.xlu0 %210
    %v212 = vsel %vm196, %v195, 0.0
    %213 = vadd.xlane.f32.xlu0 %v212
    %v214 = vpop.xlane.xlu0 %213
    %v215 = vld [vmem:[%s11] sm:$0x1]
    %v217 = vlaneseq
    %v218 = vshrl.u32 %v217, 7
    %v219 = vsub.s32 0, %v218
    %v220 = vrot.slane %v215, %v219
    %v222 = vadd.f32 %v199, %v220
    %v223 = vadd.f32 %v202, %v220
    %v224 = vadd.f32 %v205, %v220
    %v225 = vadd.f32 %v208, %v220
    %v226 = vadd.f32 %v211, %v220
    %v227 = vadd.f32 %v214, %v220
    %v228 = vxor.u32 %v222, 2147483648
    %v229 = vxor.u32 %v223, 2147483648
    %v230 = vxor.u32 %v224, 2147483648
    %v231 = vxor.u32 %v225, 2147483648
    %v232 = vxor.u32 %v226, 2147483648
    %v233 = vxor.u32 %v227, 2147483648
    %v234 = vmul.f32 %v228, 1.442695
    %v235 = vpow.pop %v234
    %v236 = vmul.f32 %v229, 1.442695
    %v237 = vpow.pop %v236
    %v238 = vmul.f32 %v230, 1.442695
    %v239 = vpow.pop %v238
    %v240 = vmul.f32 %v231, 1.442695
    %v241 = vpow.pop %v240
    %v242 = vmul.f32 %v232, 1.442695
    %v243 = vpow.pop %v242
    %v244 = vmul.f32 %v233, 1.442695
    %v245 = vpow.pop %v244
    %v246 = vadd.f32 %v235, 1.0
    %v247 = vadd.f32 %v237, 1.0
    %v248 = vadd.f32 %v239, 1.0
    %v249 = vadd.f32 %v241, 1.0
    %v250 = vadd.f32 %v243, 1.0
    %v251 = vadd.f32 %v245, 1.0
    %v252 = vrcp.pop %v246
    %v253 = vmul.f32 1.0, %v252
    %v254 = vrcp.pop %v247
    %v255 = vmul.f32 1.0, %v254
    %v256 = vrcp.pop %v248
    %v257 = vmul.f32 1.0, %v256
    %v258 = vrcp.pop %v249
    %v259 = vmul.f32 1.0, %v258
    %v260 = vrcp.pop %v250
    %v261 = vmul.f32 1.0, %v260
    %v262 = vrcp.pop %v251
    %v263 = vmul.f32 1.0, %v262
    %v264 = vlaneseq
    %v265 = vshrl.u32 %v264, 7
    %v266 = vadd.s32 %v265, 8
    %v267 = vlaneseq
    %v268 = vshrl.u32 %v267, 7
    %v269 = vsub.s32 0, %v268
    %v270 = vrot.slane %v90, %v269
    %vm271 = vcmp.eq.s32.totalorder %v270, %v265
    %vm272 = vcmp.eq.s32.totalorder %v270, %v266
    %v273 = vsel %vm271, 1, 0
    %v274 = vsel %vm272, 1, 0
    %v275 = vcvt.s32.f32 %v273
    %v276 = vcvt.s32.f32 %v274
    %v277 = vlaneseq
    %v278 = vshrl.u32 %v277, 7
    %v279 = vsub.s32 1, %v278
    %v280 = vrot.slane %v90, %v279
    %vm281 = vcmp.eq.s32.totalorder %v280, %v265
    %vm282 = vcmp.eq.s32.totalorder %v280, %v266
    %v283 = vsel %vm281, 1, 0
    %v284 = vsel %vm282, 1, 0
    %v285 = vcvt.s32.f32 %v283
    %v286 = vcvt.s32.f32 %v284
    %287 = vxpose.xlu0.b32.start [1/16] %v275, 128
    %288 = vxpose.xlu0.b32.cont [2/16] %v276, 128
    %289 = vxpose.xlu0.b32.cont [3/16] 0.0, 128
    %290 = vxpose.xlu0.b32.cont [4/16] 0.0, 128
    %291 = vxpose.xlu0.b32.cont [5/16] 0.0, 128
    %292 = vxpose.xlu0.b32.cont [6/16] 0.0, 128
    %293 = vxpose.xlu0.b32.cont [7/16] 0.0, 128
    %294 = vxpose.xlu0.b32.cont [8/16] 0.0, 128
    %295 = vxpose.xlu0.b32.cont [9/16] 0.0, 128
    %296 = vxpose.xlu0.b32.cont [10/16] 0.0, 128
    %297 = vxpose.xlu0.b32.cont [11/16] 0.0, 128
    %298 = vxpose.xlu0.b32.cont [12/16] 0.0, 128
    %299 = vxpose.xlu0.b32.cont [13/16] 0.0, 128
    %300 = vxpose.xlu0.b32.cont [14/16] 0.0, 128
    %301 = vxpose.xlu0.b32.cont [15/16] 0.0, 128
    %302 = vxpose.xlu0.b32.end [16/16] 0.0, 128
    %v303 = vpop.trf.xlu0
    %v304 = vpop.trf.xlu0
    %v305 = vpop.trf.xlu0
    %v306 = vpop.trf.xlu0
    %v307 = vpop.trf.xlu0
    %v308 = vpop.trf.xlu0
    %v309 = vpop.trf.xlu0
    %v310 = vpop.trf.xlu0
    %v311 = vpop.trf.xlu0
    %v312 = vpop.trf.xlu0
    %v313 = vpop.trf.xlu0
    %v314 = vpop.trf.xlu0
    %v315 = vpop.trf.xlu0
    %v316 = vpop.trf.xlu0
    %v317 = vpop.trf.xlu0
    %v318 = vpop.trf.xlu0
    %vm319 = vcmask 130048
    %v321 = vsel %vm319, %v303, 0
    %v324 = vsel %vm319, %v304, 0
    %v327 = vsel %vm319, %v305, 0
    %v330 = vsel %vm319, %v306, 0
    %v333 = vsel %vm319, %v307, 0
    %v336 = vsel %vm319, %v308, 0
    %338 = vmatprep.subr.mxu0 0.0
    %339 = vmatpush1.msra.mxu0 %v181
    %340 = vmatprep.subr.mxu0 0.0
    %341 = vmatpush1.msra.mxu0 %v182
    %342 = vmatprep.subr.mxu0 0.0
    %343 = vmatpush1.msra.mxu0 0.0
    %344 = vmatprep.subr.mxu0 0.0
    %345 = vmatpush1.msra.mxu0 0.0
    %346 = vmatprep.subr.mxu0 0.0
    %347 = vmatpush1.msra.mxu0 0.0
    %348 = vmatprep.subr.mxu0 0.0
    %349 = vmatpush1.msra.mxu0 0.0
    %350 = vmatprep.subr.mxu0 0.0
    %351 = vmatpush1.msra.mxu0 0.0
    %352 = vmatprep.subr.mxu0 0.0
    %353 = vmatpush1.msra.mxu0 0.0
    %354 = vmatprep.subr.mxu0 0.0
    %355 = vmatpush1.msra.mxu0 0.0
    %356 = vmatprep.subr.mxu0 0.0
    %357 = vmatpush1.msra.mxu0 0.0
    %358 = vmatprep.subr.mxu0 0.0
    %359 = vmatpush1.msra.mxu0 0.0
    %360 = vmatprep.subr.mxu0 0.0
    %361 = vmatpush1.msra.mxu0 0.0
    %362 = vmatprep.subr.mxu0 0.0
    %363 = vmatpush1.msra.mxu0 0.0
    %364 = vmatprep.subr.mxu0 0.0
    %365 = vmatpush1.msra.mxu0 0.0
    %366 = vmatprep.subr.mxu0 0.0
    %367 = vmatpush1.msra.mxu0 0.0
    %368 = vmatprep.subr.mxu0 0.0
    %369 = vmatpush1.msra.mxu0 0.0
    %370 = vmatprep.subr.mxu0 0.0
    %371 = vmatpush1.msra.mxu0 0.0
    %372 = vmatprep.subr.mxu0 0.0
    %373 = vmatpush1.msra.mxu0 0.0
    %374 = vmatprep.subr.mxu0 0.0
    %375 = vmatpush1.msra.mxu0 0.0
    %376 = vmatprep.subr.mxu0 0.0
    %377 = vmatpush1.msra.mxu0 0.0
    %378 = vmatprep.subr.mxu0 0.0
    %379 = vmatpush1.msra.mxu0 0.0
    %380 = vmatprep.subr.mxu0 0.0
    %381 = vmatpush1.msra.mxu0 0.0
    %382 = vmatprep.subr.mxu0 0.0
    %383 = vmatpush1.msra.mxu0 0.0
    %384 = vmatprep.subr.mxu0 0.0
    %385 = vmatpush1.msra.mxu0 0.0
    %386 = vmatprep.subr.mxu0 0.0
    %387 = vmatpush1.msra.mxu0 0.0
    %388 = vmatprep.subr.mxu0 0.0
    %389 = vmatpush1.msra.mxu0 0.0
    %390 = vmatprep.subr.mxu0 0.0
    %391 = vmatpush1.msra.mxu0 0.0
    %392 = vmatprep.subr.mxu0 0.0
    %393 = vmatpush1.msra.mxu0 0.0
    %394 = vmatprep.subr.mxu0 0.0
    %395 = vmatpush1.msra.mxu0 0.0
    %396 = vmatprep.subr.mxu0 0.0
    %397 = vmatpush1.msra.mxu0 0.0
    %398 = vmatprep.subr.mxu0 0.0
    %399 = vmatpush1.msra.mxu0 0.0
    %400 = vmatprep.subr.mxu0 0.0
    %401 = vmatpush1.msra.mxu0 0.0
    %402 = vmatprep.mubr.f32.mxu0 0.0
    %403 = vmatmul.mubr.f32.gmra.mrb[0].mxu0 %v321
    %v404 = vpop.f32.mrb[0].mxu0
    %v405 = vadd.f32 0.0, %v404
    %v406 = vpop.f32.mrb[0].mxu0
    %407 = vmatprep.mubr.f32.mxu0 0.0
    %408 = vmatmul.mubr.f32.gmra.mrb[0].mxu0 %v324
    %v409 = vpop.f32.mrb[0].mxu0
    %v410 = vadd.f32 0.0, %v409
    %v411 = vpop.f32.mrb[0].mxu0
    %412 = vmatprep.mubr.f32.mxu0 0.0
    %413 = vmatmul.mubr.f32.gmra.mrb[0].mxu0 %v327
    %v414 = vpop.f32.mrb[0].mxu0
    %v415 = vadd.f32 0.0, %v414
    %v416 = vpop.f32.mrb[0].mxu0
    %417 = vmatprep.mubr.f32.mxu0 0.0
    %418 = vmatmul.mubr.f32.gmra.mrb[0].mxu0 %v330
    %v419 = vpop.f32.mrb[0].mxu0
    %v420 = vadd.f32 0.0, %v419
    %v421 = vpop.f32.mrb[0].mxu0
    %422 = vmatprep.mubr.f32.mxu0 0.0
    %423 = vmatmul.mubr.f32.gmra.mrb[0].mxu0 %v333
    %v424 = vpop.f32.mrb[0].mxu0
    %v425 = vadd.f32 0.0, %v424
    %v426 = vpop.f32.mrb[0].mxu0
    %427 = vmatprep.mubr.f32.mxu0 0.0
    %428 = vmatmul.mubr.f32.gmra.mrb[0].mxu0 %v336
    %v429 = vpop.f32.mrb[0].mxu0
    %v430 = vadd.f32 0.0, %v429
    %v431 = vpop.f32.mrb[0].mxu0
    %432 = vdwg.mxu0
    %434 = vset.pattern.permute.xlu0 0
    %435 = vperm.xlu0 %434, %v253
    %v436 = vpop.permute.xlu0 %435
    %439 = vset.pattern.permute.xlu0 0
    %440 = vperm.xlu0 %439, %v255
    %v441 = vpop.permute.xlu0 %440
    %444 = vset.pattern.permute.xlu0 0
    %445 = vperm.xlu0 %444, %v257
    %v446 = vpop.permute.xlu0 %445
    %449 = vset.pattern.permute.xlu0 0
    %450 = vperm.xlu0 %449, %v259
    %v451 = vpop.permute.xlu0 %450
    %454 = vset.pattern.permute.xlu0 0
    %455 = vperm.xlu0 %454, %v261
    %v456 = vpop.permute.xlu0 %455
    %459 = vset.pattern.permute.xlu0 0
    %460 = vperm.xlu0 %459, %v263
    %v461 = vpop.permute.xlu0 %460
    %v463 = vmul.f32 %v436, %v405
    %v464 = vmul.f32 %v441, %v410
    %v465 = vmul.f32 %v446, %v415
    %v466 = vmul.f32 %v451, %v420
    %v467 = vmul.f32 %v456, %v425
    %v468 = vmul.f32 %v461, %v430
    %vm469 = vcmask 392192
    %v471 = vsel %vm469, %v285, 0
    %v474 = vsel %vm469, %v286, 0
    %476 = vmatprep.subr.mxu0 0.0
    %477 = vmatpush1.msra.mxu0 %v463
    %478 = vmatprep.subr.mxu0 0.0
    %479 = vmatpush1.msra.mxu0 %v464
    %480 = vmatprep.subr.mxu0 0.0
    %481 = vmatpush1.msra.mxu0 %v465
    %482 = vmatprep.subr.mxu0 0.0
    %483 = vmatpush1.msra.mxu0 %v466
    %484 = vmatprep.subr.mxu0 0.0
    %485 = vmatpush1.msra.mxu0 %v467
    %486 = vmatprep.subr.mxu0 0.0
    %487 = vmatpush1.msra.mxu0 %v468
    %488 = vmatprep.subr.mxu0 0.0
    %489 = vmatpush1.msra.mxu0 0.0
    %490 = vmatprep.subr.mxu0 0.0
    %491 = vmatpush1.msra.mxu0 0.0
    %492 = vmatprep.subr.mxu0 0.0
    %493 = vmatpush1.msra.mxu0 0.0
    %494 = vmatprep.subr.mxu0 0.0
    %495 = vmatpush1.msra.mxu0 0.0
    %496 = vmatprep.subr.mxu0 0.0
    %497 = vmatpush1.msra.mxu0 0.0
    %498 = vmatprep.subr.mxu0 0.0
    %499 = vmatpush1.msra.mxu0 0.0
    %500 = vmatprep.subr.mxu0 0.0
    %501 = vmatpush1.msra.mxu0 0.0
    %502 = vmatprep.subr.mxu0 0.0
    %503 = vmatpush1.msra.mxu0 0.0
    %504 = vmatprep.subr.mxu0 0.0
    %505 = vmatpush1.msra.mxu0 0.0
    %506 = vmatprep.subr.mxu0 0.0
    %507 = vmatpush1.msra.mxu0 0.0
    %508 = vmatprep.subr.mxu0 0.0
    %509 = vmatpush1.msra.mxu0 0.0
    %510 = vmatprep.subr.mxu0 0.0
    %511 = vmatpush1.msra.mxu0 0.0
    %512 = vmatprep.subr.mxu0 0.0
    %513 = vmatpush1.msra.mxu0 0.0
    %514 = vmatprep.subr.mxu0 0.0
    %515 = vmatpush1.msra.mxu0 0.0
    %516 = vmatprep.subr.mxu0 0.0
    %517 = vmatpush1.msra.mxu0 0.0
    %518 = vmatprep.subr.mxu0 0.0
    %519 = vmatpush1.msra.mxu0 0.0
    %520 = vmatprep.subr.mxu0 0.0
    %521 = vmatpush1.msra.mxu0 0.0
    %522 = vmatprep.subr.mxu0 0.0
    %523 = vmatpush1.msra.mxu0 0.0
    %524 = vmatprep.subr.mxu0 0.0
    %525 = vmatpush1.msra.mxu0 0.0
    %526 = vmatprep.subr.mxu0 0.0
    %527 = vmatpush1.msra.mxu0 0.0
    %528 = vmatprep.subr.mxu0 0.0
    %529 = vmatpush1.msra.mxu0 0.0
    %530 = vmatprep.subr.mxu0 0.0
    %531 = vmatpush1.msra.mxu0 0.0
    %532 = vmatprep.subr.mxu0 0.0
    %533 = vmatpush1.msra.mxu0 0.0
    %534 = vmatprep.subr.mxu0 0.0
    %535 = vmatpush1.msra.mxu0 0.0
    %536 = vmatprep.subr.mxu0 0.0
    %537 = vmatpush1.msra.mxu0 0.0
    %538 = vmatprep.subr.mxu0 0.0
    %539 = vmatpush1.msra.mxu0 0.0
    %540 = vmatprep.mubr.f32.mxu0 0.0
    %541 = vmatmul.mubr.f32.gmra.mrb[0].mxu0 %v471
    %v542 = vpop.f32.mrb[0].mxu0
    %v543 = vadd.f32 0.0, %v542
    %v544 = vpop.f32.mrb[0].mxu0
    %545 = vmatprep.mubr.f32.mxu0 0.0
    %546 = vmatmul.mubr.f32.gmra.mrb[0].mxu0 %v474
    %v547 = vpop.f32.mrb[0].mxu0
    %v548 = vadd.f32 0.0, %v547
    %v549 = vpop.f32.mrb[0].mxu0
    %550 = vdwg.mxu0
    %551 = vmatprep.subr.mxu0 0.0
    %552 = vmatpush1.msra.mxu0 %v253
    %553 = vmatprep.subr.mxu0 0.0
    %554 = vmatpush1.msra.mxu0 %v255
    %555 = vmatprep.subr.mxu0 0.0
    %556 = vmatpush1.msra.mxu0 %v257
    %557 = vmatprep.subr.mxu0 0.0
    %558 = vmatpush1.msra.mxu0 %v259
    %559 = vmatprep.subr.mxu0 0.0
    %560 = vmatpush1.msra.mxu0 %v261
    %561 = vmatprep.subr.mxu0 0.0
    %562 = vmatpush1.msra.mxu0 %v263
    %563 = vmatprep.subr.mxu0 0.0
    %564 = vmatpush1.msra.mxu0 0.0
    %565 = vmatprep.subr.mxu0 0.0
    %566 = vmatpush1.msra.mxu0 0.0
    %567 = vmatprep.subr.mxu0 0.0
    %568 = vmatpush1.msra.mxu0 0.0
    %569 = vmatprep.subr.mxu0 0.0
    %570 = vmatpush1.msra.mxu0 0.0
    %571 = vmatprep.subr.mxu0 0.0
    %572 = vmatpush1.msra.mxu0 0.0
    %573 = vmatprep.subr.mxu0 0.0
    %574 = vmatpush1.msra.mxu0 0.0
    %575 = vmatprep.subr.mxu0 0.0
    %576 = vmatpush1.msra.mxu0 0.0
    %577 = vmatprep.subr.mxu0 0.0
    %578 = vmatpush1.msra.mxu0 0.0
    %579 = vmatprep.subr.mxu0 0.0
    %580 = vmatpush1.msra.mxu0 0.0
    %581 = vmatprep.subr.mxu0 0.0
    %582 = vmatpush1.msra.mxu0 0.0
    %583 = vmatprep.subr.mxu0 0.0
    %584 = vmatpush1.msra.mxu0 0.0
    %585 = vmatprep.subr.mxu0 0.0
    %586 = vmatpush1.msra.mxu0 0.0
    %587 = vmatprep.subr.mxu0 0.0
    %588 = vmatpush1.msra.mxu0 0.0
    %589 = vmatprep.subr.mxu0 0.0
    %590 = vmatpush1.msra.mxu0 0.0
    %591 = vmatprep.subr.mxu0 0.0
    %592 = vmatpush1.msra.mxu0 0.0
    %593 = vmatprep.subr.mxu0 0.0
    %594 = vmatpush1.msra.mxu0 0.0
    %595 = vmatprep.subr.mxu0 0.0
    %596 = vmatpush1.msra.mxu0 0.0
    %597 = vmatprep.subr.mxu0 0.0
    %598 = vmatpush1.msra.mxu0 0.0
    %599 = vmatprep.subr.mxu0 0.0
    %600 = vmatpush1.msra.mxu0 0.0
    %601 = vmatprep.subr.mxu0 0.0
    %602 = vmatpush1.msra.mxu0 0.0
    %603 = vmatprep.subr.mxu0 0.0
    %604 = vmatpush1.msra.mxu0 0.0
    %605 = vmatprep.subr.mxu0 0.0
    %606 = vmatpush1.msra.mxu0 0.0
    %607 = vmatprep.subr.mxu0 0.0
    %608 = vmatpush1.msra.mxu0 0.0
    %609 = vmatprep.subr.mxu0 0.0
    %610 = vmatpush1.msra.mxu0 0.0
    %611 = vmatprep.subr.mxu0 0.0
    %612 = vmatpush1.msra.mxu0 0.0
    %613 = vmatprep.subr.mxu0 0.0
    %614 = vmatpush1.msra.mxu0 0.0
    %615 = vmatprep.mubr.f32.mxu0 0.0
    %616 = vmatmul.mubr.f32.gmra.mrb[0].mxu0 %v471
    %v617 = vpop.f32.mrb[0].mxu0
    %v618 = vadd.f32 1.0, %v617
    %v619 = vpop.f32.mrb[0].mxu0
    %620 = vmatprep.mubr.f32.mxu0 0.0
    %621 = vmatmul.mubr.f32.gmra.mrb[0].mxu0 %v474
    %v622 = vpop.f32.mrb[0].mxu0
    %v623 = vadd.f32 1.0, %v622
    %v624 = vpop.f32.mrb[0].mxu0
    %625 = vdwg.mxu0
    %v626 = vrcp.pop %v618
    %v627 = vrcp.pop %v623
    %629 = vset.pattern.permute.xlu0 0
    %630 = vperm.xlu0 %629, %v626
    %v631 = vpop.permute.xlu0 %630
    %634 = vset.pattern.permute.xlu0 0
    %635 = vperm.xlu0 %634, %v627
    %v636 = vpop.permute.xlu0 %635
    %v638 = vmul.f32 %v543, %v631
    %v639 = vmul.f32 %v548, %v636
    %v640 = vld [vmem:[#allocation2] sm:$0xff]
    %v641 = vld [vmem:[#allocation2 + $0x8] sm:$0xff]
    %v642 = vld [vmem:[#allocation2 + $0x10] sm:$0xff]
    %v643 = vld [vmem:[#allocation2 + $0x18] sm:$0xff]
    %v644 = vld [vmem:[#allocation2 + $0x20] sm:$0xff]
    %v645 = vld [vmem:[#allocation2 + $0x28] sm:$0xff]
    %v646 = vld [vmem:[#allocation2 + $0x30] sm:$0xff]
    %v647 = vld [vmem:[#allocation2 + $0x38] sm:$0xff]
    %v648 = vld [vmem:[#allocation2 + $0x40] sm:$0xff]
    %v649 = vld [vmem:[#allocation2 + $0x48] sm:$0xff]
    %v650 = vld [vmem:[#allocation2 + $0x50] sm:$0xff]
    %v651 = vld [vmem:[#allocation2 + $0x58] sm:$0xff]
    %v652 = vld [vmem:[#allocation2 + $0x60] sm:$0xff]
    %v653 = vld [vmem:[#allocation2 + $0x68] sm:$0xff]
    %v654 = vld [vmem:[#allocation2 + $0x70] sm:$0xff]
    %v655 = vld [vmem:[#allocation2 + $0x78] sm:$0xff]
    %656 = vmatprep.subr.mxu0 0.0
    %657 = vmatpush1.msra.mxu0 %v640
    %658 = vmatprep.subr.mxu0 0.0
    %659 = vmatpush1.msra.mxu0 %v641
    %660 = vmatprep.subr.mxu0 0.0
    %661 = vmatpush1.msra.mxu0 %v642
    %662 = vmatprep.subr.mxu0 0.0
    %663 = vmatpush1.msra.mxu0 %v643
    %664 = vmatprep.subr.mxu0 0.0
    %665 = vmatpush1.msra.mxu0 %v644
    %666 = vmatprep.subr.mxu0 0.0
    %667 = vmatpush1.msra.mxu0 %v645
    %668 = vmatprep.subr.mxu0 0.0
    %669 = vmatpush1.msra.mxu0 %v646
    %670 = vmatprep.subr.mxu0 0.0
    %671 = vmatpush1.msra.mxu0 %v647
    %672 = vmatprep.subr.mxu0 0.0
    %673 = vmatpush1.msra.mxu0 %v648
    %674 = vmatprep.subr.mxu0 0.0
    %675 = vmatpush1.msra.mxu0 %v649
    %676 = vmatprep.subr.mxu0 0.0
    %677 = vmatpush1.msra.mxu0 %v650
    %678 = vmatprep.subr.mxu0 0.0
    %679 = vmatpush1.msra.mxu0 %v651
    %680 = vmatprep.subr.mxu0 0.0
    %681 = vmatpush1.msra.mxu0 %v652
    %682 = vmatprep.subr.mxu0 0.0
    %683 = vmatpush1.msra.mxu0 %v653
    %684 = vmatprep.subr.mxu0 0.0
    %685 = vmatpush1.msra.mxu0 %v654
    %686 = vmatprep.subr.mxu0 0.0
    %687 = vmatpush1.msra.mxu0 %v655
    %688 = vmatprep.subr.mxu0 0.0
    %689 = vmatpush1.msra.mxu0 0.0
    %690 = vmatprep.subr.mxu0 0.0
    %691 = vmatpush1.msra.mxu0 0.0
    %692 = vmatprep.subr.mxu0 0.0
    %693 = vmatpush1.msra.mxu0 0.0
    %694 = vmatprep.subr.mxu0 0.0
    %695 = vmatpush1.msra.mxu0 0.0
    %696 = vmatprep.subr.mxu0 0.0
    %697 = vmatpush1.msra.mxu0 0.0
    %698 = vmatprep.subr.mxu0 0.0
    %699 = vmatpush1.msra.mxu0 0.0
    %700 = vmatprep.subr.mxu0 0.0
    %701 = vmatpush1.msra.mxu0 0.0
    %702 = vmatprep.subr.mxu0 0.0
    %703 = vmatpush1.msra.mxu0 0.0
    %704 = vmatprep.subr.mxu0 0.0
    %705 = vmatpush1.msra.mxu0 0.0
    %706 = vmatprep.subr.mxu0 0.0
    %707 = vmatpush1.msra.mxu0 0.0
    %708 = vmatprep.subr.mxu0 0.0
    %709 = vmatpush1.msra.mxu0 0.0
    %710 = vmatprep.subr.mxu0 0.0
    %711 = vmatpush1.msra.mxu0 0.0
    %712 = vmatprep.subr.mxu0 0.0
    %713 = vmatpush1.msra.mxu0 0.0
    %714 = vmatprep.subr.mxu0 0.0
    %715 = vmatpush1.msra.mxu0 0.0
    %716 = vmatprep.subr.mxu0 0.0
    %717 = vmatpush1.msra.mxu0 0.0
    %718 = vmatprep.subr.mxu0 0.0
    %719 = vmatpush1.msra.mxu0 0.0
    %720 = vmatprep.mubr.f32.mxu0 0.0
    %721 = vmatmul.mubr.f32.gmra.mrb[0].mxu0 %v638
    %v722 = vpop.f32.mrb[0].mxu0
    %v723 = vadd.f32 0.0, %v722
    %v724 = vpop.f32.mrb[0].mxu0
    %725 = vmatprep.mubr.f32.mxu0 0.0
    %726 = vmatmul.mubr.f32.gmra.mrb[0].mxu0 %v639
    %v727 = vpop.f32.mrb[0].mxu0
    %v728 = vadd.f32 0.0, %v727
    %v729 = vpop.f32.mrb[0].mxu0
    %730 = vdwg.mxu0
    %v731 = vadd.f32 %v181, %v723
    %v732 = vadd.f32 %v182, %v728
    %v733 = vld [vmem:[%s9] sm:$0x1]
    %v735 = vlaneseq
    %v736 = vshrl.u32 %v735, 7
    %v737 = vsub.s32 0, %v736
    %v738 = vrot.slane %v733, %v737
    %v740 = vadd.f32 %v731, %v738
    %v741 = vadd.f32 %v732, %v738
    %v742 = vmax.f32 %v740, 0.0
    %v743 = vmax.f32 %v741, 0.0
    %v745 = vsel %vm319, 0.0625, 0
    %747 = vmatprep.subr.mxu0 0.0
    %748 = vmatpush1.msra.mxu0 %v742
    %749 = vmatprep.subr.mxu0 0.0
    %750 = vmatpush1.msra.mxu0 %v743
    %751 = vmatprep.subr.mxu0 0.0
    %752 = vmatpush1.msra.mxu0 0.0
    %753 = vmatprep.subr.mxu0 0.0
    %754 = vmatpush1.msra.mxu0 0.0
    %755 = vmatprep.subr.mxu0 0.0
    %756 = vmatpush1.msra.mxu0 0.0
    %757 = vmatprep.subr.mxu0 0.0
    %758 = vmatpush1.msra.mxu0 0.0
    %759 = vmatprep.subr.mxu0 0.0
    %760 = vmatpush1.msra.mxu0 0.0
    %761 = vmatprep.subr.mxu0 0.0
    %762 = vmatpush1.msra.mxu0 0.0
    %763 = vmatprep.subr.mxu0 0.0
    %764 = vmatpush1.msra.mxu0 0.0
    %765 = vmatprep.subr.mxu0 0.0
    %766 = vmatpush1.msra.mxu0 0.0
    %767 = vmatprep.subr.mxu0 0.0
    %768 = vmatpush1.msra.mxu0 0.0
    %769 = vmatprep.subr.mxu0 0.0
    %770 = vmatpush1.msra.mxu0 0.0
    %771 = vmatprep.subr.mxu0 0.0
    %772 = vmatpush1.msra.mxu0 0.0
    %773 = vmatprep.subr.mxu0 0.0
    %774 = vmatpush1.msra.mxu0 0.0
    %775 = vmatprep.subr.mxu0 0.0
    %776 = vmatpush1.msra.mxu0 0.0
    %777 = vmatprep.subr.mxu0 0.0
    %778 = vmatpush1.msra.mxu0 0.0
    %779 = vmatprep.subr.mxu0 0.0
    %780 = vmatpush1.msra.mxu0 0.0
    %781 = vmatprep.subr.mxu0 0.0
    %782 = vmatpush1.msra.mxu0 0.0
    %783 = vmatprep.subr.mxu0 0.0
    %784 = vmatpush1.msra.mxu0 0.0
    %785 = vmatprep.subr.mxu0 0.0
    %786 = vmatpush1.msra.mxu0 0.0
    %787 = vmatprep.subr.mxu0 0.0
    %788 = vmatpush1.msra.mxu0 0.0
    %789 = vmatprep.subr.mxu0 0.0
    %790 = vmatpush1.msra.mxu0 0.0
    %791 = vmatprep.subr.mxu0 0.0
    %792 = vmatpush1.msra.mxu0 0.0
    %793 = vmatprep.subr.mxu0 0.0
    %794 = vmatpush1.msra.mxu0 0.0
    %795 = vmatprep.subr.mxu0 0.0
    %796 = vmatpush1.msra.mxu0 0.0
    %797 = vmatprep.subr.mxu0 0.0
    %798 = vmatpush1.msra.mxu0 0.0
    %799 = vmatprep.subr.mxu0 0.0
    %800 = vmatpush1.msra.mxu0 0.0
    %801 = vmatprep.subr.mxu0 0.0
    %802 = vmatpush1.msra.mxu0 0.0
    %803 = vmatprep.subr.mxu0 0.0
    %804 = vmatpush1.msra.mxu0 0.0
    %805 = vmatprep.subr.mxu0 0.0
    %806 = vmatpush1.msra.mxu0 0.0
    %807 = vmatprep.subr.mxu0 0.0
    %808 = vmatpush1.msra.mxu0 0.0
    %809 = vmatprep.subr.mxu0 0.0
    %810 = vmatpush1.msra.mxu0 0.0
    %811 = vmatprep.mubr.f32.mxu0 0.0
    %812 = vmatmul.mubr.f32.gmra.mrb[0].mxu0 %v745
    %v813 = vpop.f32.mrb[0].mxu0
    %v814 = vadd.f32 0.0, %v813
    %v815 = vpop.f32.mrb[0].mxu0
    %816 = vdwg.mxu0
    %v817 = vld [vmem:[%s12] sm:$0xff]
    %v818 = vld [vmem:[%s12 + $0x8] sm:$0xff]
    %v819 = vld [vmem:[%s12 + $0x10] sm:$0xff]
    %v820 = vld [vmem:[%s12 + $0x18] sm:$0xff]
    %v821 = vld [vmem:[%s12 + $0x20] sm:$0xff]
    %v822 = vld [vmem:[%s12 + $0x28] sm:$0xff]
    %v823 = vld [vmem:[%s12 + $0x30] sm:$0xff]
    %v824 = vld [vmem:[%s12 + $0x38] sm:$0xff]
    %v825 = vld [vmem:[%s12 + $0x40] sm:$0xff]
    %v826 = vld [vmem:[%s12 + $0x48] sm:$0xff]
    %v827 = vld [vmem:[%s12 + $0x50] sm:$0xff]
    %v828 = vld [vmem:[%s12 + $0x58] sm:$0xff]
    %v829 = vld [vmem:[%s12 + $0x60] sm:$0xff]
    %v830 = vld [vmem:[%s12 + $0x68] sm:$0xff]
    %v831 = vld [vmem:[%s12 + $0x70] sm:$0xff]
    %v832 = vld [vmem:[%s12 + $0x78] sm:$0xff]
    %v833 = vld [vmem:[%s13] sm:$0x1]
    %834 = vmatprep.subr.mxu0 0.0
    %835 = vmatpush1.msra.mxu0 %v817
    %836 = vmatprep.subr.mxu0 0.0
    %837 = vmatpush1.msra.mxu0 %v818
    %838 = vmatprep.subr.mxu0 0.0
    %839 = vmatpush1.msra.mxu0 %v819
    %840 = vmatprep.subr.mxu0 0.0
    %841 = vmatpush1.msra.mxu0 %v820
    %842 = vmatprep.subr.mxu0 0.0
    %843 = vmatpush1.msra.mxu0 %v821
    %844 = vmatprep.subr.mxu0 0.0
    %845 = vmatpush1.msra.mxu0 %v822
    %846 = vmatprep.subr.mxu0 0.0
    %847 = vmatpush1.msra.mxu0 %v823
    %848 = vmatprep.subr.mxu0 0.0
    %849 = vmatpush1.msra.mxu0 %v824
    %850 = vmatprep.subr.mxu0 0.0
    %851 = vmatpush1.msra.mxu0 %v825
    %852 = vmatprep.subr.mxu0 0.0
    %853 = vmatpush1.msra.mxu0 %v826
    %854 = vmatprep.subr.mxu0 0.0
    %855 = vmatpush1.msra.mxu0 %v827
    %856 = vmatprep.subr.mxu0 0.0
    %857 = vmatpush1.msra.mxu0 %v828
    %858 = vmatprep.subr.mxu0 0.0
    %859 = vmatpush1.msra.mxu0 %v829
    %860 = vmatprep.subr.mxu0 0.0
    %861 = vmatpush1.msra.mxu0 %v830
    %862 = vmatprep.subr.mxu0 0.0
    %863 = vmatpush1.msra.mxu0 %v831
    %864 = vmatprep.subr.mxu0 0.0
    %865 = vmatpush1.msra.mxu0 %v832
    %866 = vmatprep.subr.mxu0 0.0
    %867 = vmatpush1.msra.mxu0 0.0
    %868 = vmatprep.subr.mxu0 0.0
    %869 = vmatpush1.msra.mxu0 0.0
    %870 = vmatprep.subr.mxu0 0.0
    %871 = vmatpush1.msra.mxu0 0.0
    %872 = vmatprep.subr.mxu0 0.0
    %873 = vmatpush1.msra.mxu0 0.0
    %874 = vmatprep.subr.mxu0 0.0
    %875 = vmatpush1.msra.mxu0 0.0
    %876 = vmatprep.subr.mxu0 0.0
    %877 = vmatpush1.msra.mxu0 0.0
    %878 = vmatprep.subr.mxu0 0.0
    %879 = vmatpush1.msra.mxu0 0.0
    %880 = vmatprep.subr.mxu0 0.0
    %881 = vmatpush1.msra.mxu0 0.0
    %882 = vmatprep.subr.mxu0 0.0
    %883 = vmatpush1.msra.mxu0 0.0
    %884 = vmatprep.subr.mxu0 0.0
    %885 = vmatpush1.msra.mxu0 0.0
    %886 = vmatprep.subr.mxu0 0.0
    %887 = vmatpush1.msra.mxu0 0.0
    %888 = vmatprep.subr.mxu0 0.0
    %889 = vmatpush1.msra.mxu0 0.0
    %890 = vmatprep.subr.mxu0 0.0
    %891 = vmatpush1.msra.mxu0 0.0
    %892 = vmatprep.subr.mxu0 0.0
    %893 = vmatpush1.msra.mxu0 0.0
    %894 = vmatprep.subr.mxu0 0.0
    %895 = vmatpush1.msra.mxu0 0.0
    %896 = vmatprep.subr.mxu0 0.0
    %897 = vmatpush1.msra.mxu0 0.0
    %898 = vmatprep.mubr.f32.mxu0 0.0
    %899 = vmatmul.mubr.f32.gmra.mrb[0].mxu0 %v814
    %v900 = vpop.f32.mrb[0].mxu0
    %v901 = vadd.f32 %v833, %v900
    %v902 = vpop.f32.mrb[0].mxu0
    %903 = vdwg.mxu0
    %v904 = vmax.f32 %v901, 0.0
    %v905 = vld [vmem:[#allocation5] sm:$0xff]
    %v906 = vld [vmem:[#allocation5 + $0x8] sm:$0xff]
    %v907 = vld [vmem:[#allocation5 + $0x10] sm:$0xff]
    %v908 = vld [vmem:[#allocation5 + $0x18] sm:$0xff]
    %v909 = vld [vmem:[#allocation5 + $0x20] sm:$0xff]
    %v910 = vld [vmem:[#allocation5 + $0x28] sm:$0xff]
    %v911 = vld [vmem:[#allocation5 + $0x30] sm:$0xff]
    %v912 = vld [vmem:[#allocation5 + $0x38] sm:$0xff]
    %v913 = vld [vmem:[#allocation5 + $0x40] sm:$0xff]
    %v914 = vld [vmem:[#allocation5 + $0x48] sm:$0xff]
    %v915 = vld [vmem:[#allocation5 + $0x50] sm:$0xff]
    %v916 = vld [vmem:[#allocation5 + $0x58] sm:$0xff]
    %v917 = vld [vmem:[#allocation5 + $0x60] sm:$0xff]
    %v918 = vld [vmem:[#allocation5 + $0x68] sm:$0xff]
    %v919 = vld [vmem:[#allocation5 + $0x70] sm:$0xff]
    %v920 = vld [vmem:[#allocation5 + $0x78] sm:$0xff]
    %v921 = vld [vmem:[%s15] sm:$0x1]
    %922 = vmatprep.subr.mxu0 0.0
    %923 = vmatpush1.msra.mxu0 %v905
    %924 = vmatprep.subr.mxu0 0.0
    %925 = vmatpush1.msra.mxu0 %v906
    %926 = vmatprep.subr.mxu0 0.0
    %927 = vmatpush1.msra.mxu0 %v907
    %928 = vmatprep.subr.mxu0 0.0
    %929 = vmatpush1.msra.mxu0 %v908
    %930 = vmatprep.subr.mxu0 0.0
    %931 = vmatpush1.msra.mxu0 %v909
    %932 = vmatprep.subr.mxu0 0.0
    %933 = vmatpush1.msra.mxu0 %v910
    %934 = vmatprep.subr.mxu0 0.0
    %935 = vmatpush1.msra.mxu0 %v911
    %936 = vmatprep.subr.mxu0 0.0
    %937 = vmatpush1.msra.mxu0 %v912
    %938 = vmatprep.subr.mxu0 0.0
    %939 = vmatpush1.msra.mxu0 %v913
    %940 = vmatprep.subr.mxu0 0.0
    %941 = vmatpush1.msra.mxu0 %v914
    %942 = vmatprep.subr.mxu0 0.0
    %943 = vmatpush1.msra.mxu0 %v915
    %944 = vmatprep.subr.mxu0 0.0
    %945 = vmatpush1.msra.mxu0 %v916
    %946 = vmatprep.subr.mxu0 0.0
    %947 = vmatpush1.msra.mxu0 %v917
    %948 = vmatprep.subr.mxu0 0.0
    %949 = vmatpush1.msra.mxu0 %v918
    %950 = vmatprep.subr.mxu0 0.0
    %951 = vmatpush1.msra.mxu0 %v919
    %952 = vmatprep.subr.mxu0 0.0
    %953 = vmatpush1.msra.mxu0 %v920
    %954 = vmatprep.subr.mxu0 0.0
    %955 = vmatpush1.msra.mxu0 0.0
    %956 = vmatprep.subr.mxu0 0.0
    %957 = vmatpush1.msra.mxu0 0.0
    %958 = vmatprep.subr.mxu0 0.0
    %959 = vmatpush1.msra.mxu0 0.0
    %960 = vmatprep.subr.mxu0 0.0
    %961 = vmatpush1.msra.mxu0 0.0
    %962 = vmatprep.subr.mxu0 0.0
    %963 = vmatpush1.msra.mxu0 0.0
    %964 = vmatprep.subr.mxu0 0.0
    %965 = vmatpush1.msra.mxu0 0.0
    %966 = vmatprep.subr.mxu0 0.0
    %967 = vmatpush1.msra.mxu0 0.0
    %968 = vmatprep.subr.mxu0 0.0
    %969 = vmatpush1.msra.mxu0 0.0
    %970 = vmatprep.subr.mxu0 0.0
    %971 = vmatpush1.msra.mxu0 0.0
    %972 = vmatprep.subr.mxu0 0.0
    %973 = vmatpush1.msra.mxu0 0.0
    %974 = vmatprep.subr.mxu0 0.0
    %975 = vmatpush1.msra.mxu0 0.0
    %976 = vmatprep.subr.mxu0 0.0
    %977 = vmatpush1.msra.mxu0 0.0
    %978 = vmatprep.subr.mxu0 0.0
    %979 = vmatpush1.msra.mxu0 0.0
    %980 = vmatprep.subr.mxu0 0.0
    %981 = vmatpush1.msra.mxu0 0.0
    %982 = vmatprep.subr.mxu0 0.0
    %983 = vmatpush1.msra.mxu0 0.0
    %984 = vmatprep.subr.mxu0 0.0
    %985 = vmatpush1.msra.mxu0 0.0
    %986 = vmatprep.mubr.f32.mxu0 0.0
    %987 = vmatmul.mubr.f32.gmra.mrb[0].mxu0 %v904
    %v988 = vpop.f32.mrb[0].mxu0
    %v989 = vadd.f32 %v921, %v988
    %v990 = vpop.f32.mrb[0].mxu0
    %991 = vdwg.mxu0
    %992 = vst [vmem:[#allocation7] sm:$0x1] %v989
    %v993 = vld [vmem:[%s3] sm:$0xff]
    %v994 = vld [vmem:[%s3 + $0x8] sm:$0xff]
    %v995 = vld [vmem:[%s4] sm:$0xff]
    %v996 = vld [vmem:[%s4 + $0x8] sm:$0xff]
    %v997 = vld [vmem:[%s4 + $0x10] sm:$0xff]
    %v998 = vld [vmem:[%s4 + $0x18] sm:$0xff]
    %v999 = vld [vmem:[%s4 + $0x20] sm:$0xff]
    %v1000 = vld [vmem:[%s5] sm:$0x3]
    %s1001 = scalar_lea.vmem %s6, 8
    %v1002 = vld [vmem:[%s1001] sm:$0xff]
    %s1003 = scalar_lea.vmem %s7, 1
    %v1004 = vld [vmem:[%s1003] sm:$0x1]
    %v1006 = vlaneseq
    %v1007 = vshrl.u32 %v1006, 7
    %v1008 = vsub.s32 0, %v1007
    %v1009 = vrot.slane %v1004, %v1008
    %v1012 = vsel %vm99, %v993, 0
    %v1015 = vsel %vm99, %v994, 0
    %1017 = vmatprep.subr.mxu0 0.0
    %1018 = vmatpush1.msra.mxu0 %v1002
    %1019 = vmatprep.subr.mxu0 0.0
    %1020 = vmatpush1.msra.mxu0 0.0
    %1021 = vmatprep.subr.mxu0 0.0
    %1022 = vmatpush1.msra.mxu0 0.0
    %1023 = vmatprep.subr.mxu0 0.0
    %1024 = vmatpush1.msra.mxu0 0.0
    %1025 = vmatprep.subr.mxu0 0.0
    %1026 = vmatpush1.msra.mxu0 0.0
    %1027 = vmatprep.subr.mxu0 0.0
    %1028 = vmatpush1.msra.mxu0 0.0
    %1029 = vmatprep.subr.mxu0 0.0
    %1030 = vmatpush1.msra.mxu0 0.0
    %1031 = vmatprep.subr.mxu0 0.0
    %1032 = vmatpush1.msra.mxu0 0.0
    %1033 = vmatprep.subr.mxu0 0.0
    %1034 = vmatpush1.msra.mxu0 0.0
    %1035 = vmatprep.subr.mxu0 0.0
    %1036 = vmatpush1.msra.mxu0 0.0
    %1037 = vmatprep.subr.mxu0 0.0
    %1038 = vmatpush1.msra.mxu0 0.0
    %1039 = vmatprep.subr.mxu0 0.0
    %1040 = vmatpush1.msra.mxu0 0.0
    %1041 = vmatprep.subr.mxu0 0.0
    %1042 = vmatpush1.msra.mxu0 0.0
    %1043 = vmatprep.subr.mxu0 0.0
    %1044 = vmatpush1.msra.mxu0 0.0
    %1045 = vmatprep.subr.mxu0 0.0
    %1046 = vmatpush1.msra.mxu0 0.0
    %1047 = vmatprep.subr.mxu0 0.0
    %1048 = vmatpush1.msra.mxu0 0.0
    %1049 = vmatprep.subr.mxu0 0.0
    %1050 = vmatpush1.msra.mxu0 0.0
    %1051 = vmatprep.subr.mxu0 0.0
    %1052 = vmatpush1.msra.mxu0 0.0
    %1053 = vmatprep.subr.mxu0 0.0
    %1054 = vmatpush1.msra.mxu0 0.0
    %1055 = vmatprep.subr.mxu0 0.0
    %1056 = vmatpush1.msra.mxu0 0.0
    %1057 = vmatprep.subr.mxu0 0.0
    %1058 = vmatpush1.msra.mxu0 0.0
    %1059 = vmatprep.subr.mxu0 0.0
    %1060 = vmatpush1.msra.mxu0 0.0
    %1061 = vmatprep.subr.mxu0 0.0
    %1062 = vmatpush1.msra.mxu0 0.0
    %1063 = vmatprep.subr.mxu0 0.0
    %1064 = vmatpush1.msra.mxu0 0.0
    %1065 = vmatprep.subr.mxu0 0.0
    %1066 = vmatpush1.msra.mxu0 0.0
    %1067 = vmatprep.subr.mxu0 0.0
    %1068 = vmatpush1.msra.mxu0 0.0
    %1069 = vmatprep.subr.mxu0 0.0
    %1070 = vmatpush1.msra.mxu0 0.0
    %1071 = vmatprep.subr.mxu0 0.0
    %1072 = vmatpush1.msra.mxu0 0.0
    %1073 = vmatprep.subr.mxu0 0.0
    %1074 = vmatpush1.msra.mxu0 0.0
    %1075 = vmatprep.subr.mxu0 0.0
    %1076 = vmatpush1.msra.mxu0 0.0
    %1077 = vmatprep.subr.mxu0 0.0
    %1078 = vmatpush1.msra.mxu0 0.0
    %1079 = vmatprep.subr.mxu0 0.0
    %1080 = vmatpush1.msra.mxu0 0.0
    %1081 = vmatprep.mubr.f32.mxu0 0.0
    %1082 = vmatmul.mubr.f32.gmra.mrb[0].mxu0 %v1012
    %v1083 = vpop.f32.mrb[0].mxu0
    %v1084 = vadd.f32 %v1009, %v1083
    %v1085 = vpop.f32.mrb[0].mxu0
    %1086 = vmatprep.mubr.f32.mxu0 0.0
    %1087 = vmatmul.mubr.f32.gmra.mrb[0].mxu0 %v1015
    %v1088 = vpop.f32.mrb[0].mxu0
    %v1089 = vadd.f32 %v1009, %v1088
    %v1090 = vpop.f32.mrb[0].mxu0
    %1091 = vdwg.mxu0
    %v1092 = vmax.f32 %v1084, 0.0
    %v1093 = vmax.f32 %v1089, 0.0
    %s1094 = scalar_lea.vmem %s10, 1
    %v1095 = vld [vmem:[%s1094] sm:$0x1]
    %v1097 = vlaneseq
    %v1098 = vshrl.u32 %v1097, 7
    %v1099 = vsub.s32 0, %v1098
    %v1100 = vrot.slane %v1095, %v1099
    %v1102 = vmul.f32 %v995, %v1100
    %v1103 = vmul.f32 %v996, %v1100
    %v1104 = vmul.f32 %v997, %v1100
    %v1105 = vmul.f32 %v998, %v1100
    %v1106 = vmul.f32 %v999, %v1100
    %v1107 = vsel %vm196, %v1102, 0.0
    %1108 = vadd.xlane.f32.xlu0 %v1107
    %v1109 = vpop.xlane.xlu0 %1108
    %v1110 = vsel %vm196, %v1103, 0.0
    %1111 = vadd.xlane.f32.xlu0 %v1110
    %v1112 = vpop.xlane.xlu0 %1111
    %v1113 = vsel %vm196, %v1104, 0.0
    %1114 = vadd.xlane.f32.xlu0 %v1113
    %v1115 = vpop.xlane.xlu0 %1114
    %v1116 = vsel %vm196, %v1105, 0.0
    %1117 = vadd.xlane.f32.xlu0 %v1116
    %v1118 = vpop.xlane.xlu0 %1117
    %v1119 = vsel %vm196, %v1106, 0.0
    %1120 = vadd.xlane.f32.xlu0 %v1119
    %v1121 = vpop.xlane.xlu0 %1120
    %s1122 = scalar_lea.vmem %s11, 1
    %v1123 = vld [vmem:[%s1122] sm:$0x1]
    %v1125 = vlaneseq
    %v1126 = vshrl.u32 %v1125, 7
    %v1127 = vsub.s32 0, %v1126
    %v1128 = vrot.slane %v1123, %v1127
    %v1130 = vadd.f32 %v1109, %v1128
    %v1131 = vadd.f32 %v1112, %v1128
    %v1132 = vadd.f32 %v1115, %v1128
    %v1133 = vadd.f32 %v1118, %v1128
    %v1134 = vadd.f32 %v1121, %v1128
    %v1135 = vxor.u32 %v1130, 2147483648
    %v1136 = vxor.u32 %v1131, 2147483648
    %v1137 = vxor.u32 %v1132, 2147483648
    %v1138 = vxor.u32 %v1133, 2147483648
    %v1139 = vxor.u32 %v1134, 2147483648
    %v1140 = vmul.f32 %v1135, 1.442695
    %v1141 = vpow.pop %v1140
    %v1142 = vmul.f32 %v1136, 1.442695
    %v1143 = vpow.pop %v1142
    %v1144 = vmul.f32 %v1137, 1.442695
    %v1145 = vpow.pop %v1144
    %v1146 = vmul.f32 %v1138, 1.442695
    %v1147 = vpow.pop %v1146
    %v1148 = vmul.f32 %v1139, 1.442695
    %v1149 = vpow.pop %v1148
    %v1150 = vadd.f32 %v1141, 1.0
    %v1151 = vadd.f32 %v1143, 1.0
    %v1152 = vadd.f32 %v1145, 1.0
    %v1153 = vadd.f32 %v1147, 1.0
    %v1154 = vadd.f32 %v1149, 1.0
    %v1155 = vrcp.pop %v1150
    %v1156 = vmul.f32 1.0, %v1155
    %v1157 = vrcp.pop %v1151
    %v1158 = vmul.f32 1.0, %v1157
    %v1159 = vrcp.pop %v1152
    %v1160 = vmul.f32 1.0, %v1159
    %v1161 = vrcp.pop %v1153
    %v1162 = vmul.f32 1.0, %v1161
    %v1163 = vrcp.pop %v1154
    %v1164 = vmul.f32 1.0, %v1163
    %v1165 = vlaneseq
    %v1166 = vshrl.u32 %v1165, 7
    %v1167 = vsub.s32 0, %v1166
    %v1168 = vrot.slane %v1000, %v1167
    %vm1169 = vcmp.eq.s32.totalorder %v1168, %v265
    %vm1170 = vcmp.eq.s32.totalorder %v1168, %v266
    %v1171 = vsel %vm1169, 1, 0
    %v1172 = vsel %vm1170, 1, 0
    %v1173 = vcvt.s32.f32 %v1171
    %v1174 = vcvt.s32.f32 %v1172
    %v1175 = vlaneseq
    %v1176 = vshrl.u32 %v1175, 7
    %v1177 = vsub.s32 1, %v1176
    %v1178 = vrot.slane %v1000, %v1177
    %vm1179 = vcmp.eq.s32.totalorder %v1178, %v265
    %vm1180 = vcmp.eq.s32.totalorder %v1178, %v266
    %v1181 = vsel %vm1179, 1, 0
    %v1182 = vsel %vm1180, 1, 0
    %v1183 = vcvt.s32.f32 %v1181
    %v1184 = vcvt.s32.f32 %v1182
    %1185 = vxpose.xlu0.b32.start [1/16] %v1173, 128
    %1186 = vxpose.xlu0.b32.cont [2/16] %v1174, 128
    %1187 = vxpose.xlu0.b32.cont [3/16] 0.0, 128
    %1188 = vxpose.xlu0.b32.cont [4/16] 0.0, 128
    %1189 = vxpose.xlu0.b32.cont [5/16] 0.0, 128
    %1190 = vxpose.xlu0.b32.cont [6/16] 0.0, 128
    %1191 = vxpose.xlu0.b32.cont [7/16] 0.0, 128
    %1192 = vxpose.xlu0.b32.cont [8/16] 0.0, 128
    %1193 = vxpose.xlu0.b32.cont [9/16] 0.0, 128
    %1194 = vxpose.xlu0.b32.cont [10/16] 0.0, 128
    %1195 = vxpose.xlu0.b32.cont [11/16] 0.0, 128
    %1196 = vxpose.xlu0.b32.cont [12/16] 0.0, 128
    %1197 = vxpose.xlu0.b32.cont [13/16] 0.0, 128
    %1198 = vxpose.xlu0.b32.cont [14/16] 0.0, 128
    %1199 = vxpose.xlu0.b32.cont [15/16] 0.0, 128
    %1200 = vxpose.xlu0.b32.end [16/16] 0.0, 128
    %v1201 = vpop.trf.xlu0
    %v1202 = vpop.trf.xlu0
    %v1203 = vpop.trf.xlu0
    %v1204 = vpop.trf.xlu0
    %v1205 = vpop.trf.xlu0
    %v1206 = vpop.trf.xlu0
    %v1207 = vpop.trf.xlu0
    %v1208 = vpop.trf.xlu0
    %v1209 = vpop.trf.xlu0
    %v1210 = vpop.trf.xlu0
    %v1211 = vpop.trf.xlu0
    %v1212 = vpop.trf.xlu0
    %v1213 = vpop.trf.xlu0
    %v1214 = vpop.trf.xlu0
    %v1215 = vpop.trf.xlu0
    %v1216 = vpop.trf.xlu0
    %v1218 = vsel %vm319, %v1201, 0
    %v1221 = vsel %vm319, %v1202, 0
    %v1224 = vsel %vm319, %v1203, 0
    %v1227 = vsel %vm319, %v1204, 0
    %v1230 = vsel %vm319, %v1205, 0
    %1232 = vmatprep.subr.mxu0 0.0
    %1233 = vmatpush1.msra.mxu0 %v1092
    %1234 = vmatprep.subr.mxu0 0.0
    %1235 = vmatpush1.msra.mxu0 %v1093
    %1236 = vmatprep.subr.mxu0 0.0
    %1237 = vmatpush1.msra.mxu0 0.0
    %1238 = vmatprep.subr.mxu0 0.0
    %1239 = vmatpush1.msra.mxu0 0.0
    %1240 = vmatprep.subr.mxu0 0.0
    %1241 = vmatpush1.msra.mxu0 0.0
    %1242 = vmatprep.subr.mxu0 0.0
    %1243 = vmatpush1.msra.mxu0 0.0
    %1244 = vmatprep.subr.mxu0 0.0
    %1245 = vmatpush1.msra.mxu0 0.0
    %1246 = vmatprep.subr.mxu0 0.0
    %1247 = vmatpush1.msra.mxu0 0.0
    %1248 = vmatprep.subr.mxu0 0.0
    %1249 = vmatpush1.msra.mxu0 0.0
    %1250 = vmatprep.subr.mxu0 0.0
    %1251 = vmatpush1.msra.mxu0 0.0
    %1252 = vmatprep.subr.mxu0 0.0
    %1253 = vmatpush1.msra.mxu0 0.0
    %1254 = vmatprep.subr.mxu0 0.0
    %1255 = vmatpush1.msra.mxu0 0.0
    %1256 = vmatprep.subr.mxu0 0.0
    %1257 = vmatpush1.msra.mxu0 0.0
    %1258 = vmatprep.subr.mxu0 0.0
    %1259 = vmatpush1.msra.mxu0 0.0
    %1260 = vmatprep.subr.mxu0 0.0
    %1261 = vmatpush1.msra.mxu0 0.0
    %1262 = vmatprep.subr.mxu0 0.0
    %1263 = vmatpush1.msra.mxu0 0.0
    %1264 = vmatprep.subr.mxu0 0.0
    %1265 = vmatpush1.msra.mxu0 0.0
    %1266 = vmatprep.subr.mxu0 0.0
    %1267 = vmatpush1.msra.mxu0 0.0
    %1268 = vmatprep.subr.mxu0 0.0
    %1269 = vmatpush1.msra.mxu0 0.0
    %1270 = vmatprep.subr.mxu0 0.0
    %1271 = vmatpush1.msra.mxu0 0.0
    %1272 = vmatprep.subr.mxu0 0.0
    %1273 = vmatpush1.msra.mxu0 0.0
    %1274 = vmatprep.subr.mxu0 0.0
    %1275 = vmatpush1.msra.mxu0 0.0
    %1276 = vmatprep.subr.mxu0 0.0
    %1277 = vmatpush1.msra.mxu0 0.0
    %1278 = vmatprep.subr.mxu0 0.0
    %1279 = vmatpush1.msra.mxu0 0.0
    %1280 = vmatprep.subr.mxu0 0.0
    %1281 = vmatpush1.msra.mxu0 0.0
    %1282 = vmatprep.subr.mxu0 0.0
    %1283 = vmatpush1.msra.mxu0 0.0
    %1284 = vmatprep.subr.mxu0 0.0
    %1285 = vmatpush1.msra.mxu0 0.0
    %1286 = vmatprep.subr.mxu0 0.0
    %1287 = vmatpush1.msra.mxu0 0.0
    %1288 = vmatprep.subr.mxu0 0.0
    %1289 = vmatpush1.msra.mxu0 0.0
    %1290 = vmatprep.subr.mxu0 0.0
    %1291 = vmatpush1.msra.mxu0 0.0
    %1292 = vmatprep.subr.mxu0 0.0
    %1293 = vmatpush1.msra.mxu0 0.0
    %1294 = vmatprep.subr.mxu0 0.0
    %1295 = vmatpush1.msra.mxu0 0.0
    %1296 = vmatprep.mubr.f32.mxu0 0.0
    %1297 = vmatmul.mubr.f32.gmra.mrb[0].mxu0 %v1218
    %v1298 = vpop.f32.mrb[0].mxu0
    %v1299 = vadd.f32 0.0, %v1298
    %v1300 = vpop.f32.mrb[0].mxu0
    %1301 = vmatprep.mubr.f32.mxu0 0.0
    %1302 = vmatmul.mubr.f32.gmra.mrb[0].mxu0 %v1221
    %v1303 = vpop.f32.mrb[0].mxu0
    %v1304 = vadd.f32 0.0, %v1303
    %v1305 = vpop.f32.mrb[0].mxu0
    %1306 = vmatprep.mubr.f32.mxu0 0.0
    %1307 = vmatmul.mubr.f32.gmra.mrb[0].mxu0 %v1224
    %v1308 = vpop.f32.mrb[0].mxu0
    %v1309 = vadd.f32 0.0, %v1308
    %v1310 = vpop.f32.mrb[0].mxu0
    %1311 = vmatprep.mubr.f32.mxu0 0.0
    %1312 = vmatmul.mubr.f32.gmra.mrb[0].mxu0 %v1227
    %v1313 = vpop.f32.mrb[0].mxu0
    %v1314 = vadd.f32 0.0, %v1313
    %v1315 = vpop.f32.mrb[0].mxu0
    %1316 = vmatprep.mubr.f32.mxu0 0.0
    %1317 = vmatmul.mubr.f32.gmra.mrb[0].mxu0 %v1230
    %v1318 = vpop.f32.mrb[0].mxu0
    %v1319 = vadd.f32 0.0, %v1318
    %v1320 = vpop.f32.mrb[0].mxu0
    %1321 = vdwg.mxu0
    %1323 = vset.pattern.permute.xlu0 0
    %1324 = vperm.xlu0 %1323, %v1156
    %v1325 = vpop.permute.xlu0 %1324
    %1328 = vset.pattern.permute.xlu0 0
    %1329 = vperm.xlu0 %1328, %v1158
    %v1330 = vpop.permute.xlu0 %1329
    %1333 = vset.pattern.permute.xlu0 0
    %1334 = vperm.xlu0 %1333, %v1160
    %v1335 = vpop.permute.xlu0 %1334
    %1338 = vset.pattern.permute.xlu0 0
    %1339 = vperm.xlu0 %1338, %v1162
    %v1340 = vpop.permute.xlu0 %1339
    %1343 = vset.pattern.permute.xlu0 0
    %1344 = vperm.xlu0 %1343, %v1164
    %v1345 = vpop.permute.xlu0 %1344
    %v1347 = vmul.f32 %v1325, %v1299
    %v1348 = vmul.f32 %v1330, %v1304
    %v1349 = vmul.f32 %v1335, %v1309
    %v1350 = vmul.f32 %v1340, %v1314
    %v1351 = vmul.f32 %v1345, %v1319
    %vm1352 = vcmask 326656
    %v1354 = vsel %vm1352, %v1183, 0
    %v1357 = vsel %vm1352, %v1184, 0
    %1359 = vmatprep.subr.mxu0 0.0
    %1360 = vmatpush1.msra.mxu0 %v1347
    %1361 = vmatprep.subr.mxu0 0.0
    %1362 = vmatpush1.msra.mxu0 %v1348
    %1363 = vmatprep.subr.mxu0 0.0
    %1364 = vmatpush1.msra.mxu0 %v1349
    %1365 = vmatprep.subr.mxu0 0.0
    %1366 = vmatpush1.msra.mxu0 %v1350
    %1367 = vmatprep.subr.mxu0 0.0
    %1368 = vmatpush1.msra.mxu0 %v1351
    %1369 = vmatprep.subr.mxu0 0.0
    %1370 = vmatpush1.msra.mxu0 0.0
    %1371 = vmatprep.subr.mxu0 0.0
    %1372 = vmatpush1.msra.mxu0 0.0
    %1373 = vmatprep.subr.mxu0 0.0
    %1374 = vmatpush1.msra.mxu0 0.0
    %1375 = vmatprep.subr.mxu0 0.0
    %1376 = vmatpush1.msra.mxu0 0.0
    %1377 = vmatprep.subr.mxu0 0.0
    %1378 = vmatpush1.msra.mxu0 0.0
    %1379 = vmatprep.subr.mxu0 0.0
    %1380 = vmatpush1.msra.mxu0 0.0
    %1381 = vmatprep.subr.mxu0 0.0
    %1382 = vmatpush1.msra.mxu0 0.0
    %1383 = vmatprep.subr.mxu0 0.0
    %1384 = vmatpush1.msra.mxu0 0.0
    %1385 = vmatprep.subr.mxu0 0.0
    %1386 = vmatpush1.msra.mxu0 0.0
    %1387 = vmatprep.subr.mxu0 0.0
    %1388 = vmatpush1.msra.mxu0 0.0
    %1389 = vmatprep.subr.mxu0 0.0
    %1390 = vmatpush1.msra.mxu0 0.0
    %1391 = vmatprep.subr.mxu0 0.0
    %1392 = vmatpush1.msra.mxu0 0.0
    %1393 = vmatprep.subr.mxu0 0.0
    %1394 = vmatpush1.msra.mxu0 0.0
    %1395 = vmatprep.subr.mxu0 0.0
    %1396 = vmatpush1.msra.mxu0 0.0
    %1397 = vmatprep.subr.mxu0 0.0
    %1398 = vmatpush1.msra.mxu0 0.0
    %1399 = vmatprep.subr.mxu0 0.0
    %1400 = vmatpush1.msra.mxu0 0.0
    %1401 = vmatprep.subr.mxu0 0.0
    %1402 = vmatpush1.msra.mxu0 0.0
    %1403 = vmatprep.subr.mxu0 0.0
    %1404 = vmatpush1.msra.mxu0 0.0
    %1405 = vmatprep.subr.mxu0 0.0
    %1406 = vmatpush1.msra.mxu0 0.0
    %1407 = vmatprep.subr.mxu0 0.0
    %1408 = vmatpush1.msra.mxu0 0.0
    %1409 = vmatprep.subr.mxu0 0.0
    %1410 = vmatpush1.msra.mxu0 0.0
    %1411 = vmatprep.subr.mxu0 0.0
    %1412 = vmatpush1.msra.mxu0 0.0
    %1413 = vmatprep.subr.mxu0 0.0
    %1414 = vmatpush1.msra.mxu0 0.0
    %1415 = vmatprep.subr.mxu0 0.0
    %1416 = vmatpush1.msra.mxu0 0.0
    %1417 = vmatprep.subr.mxu0 0.0
    %1418 = vmatpush1.msra.mxu0 0.0
    %1419 = vmatprep.subr.mxu0 0.0
    %1420 = vmatpush1.msra.mxu0 0.0
    %1421 = vmatprep.subr.mxu0 0.0
    %1422 = vmatpush1.msra.mxu0 0.0
    %1423 = vmatprep.mubr.f32.mxu0 0.0
    %1424 = vmatmul.mubr.f32.gmra.mrb[0].mxu0 %v1354
    %v1425 = vpop.f32.mrb[0].mxu0
    %v1426 = vadd.f32 0.0, %v1425
    %v1427 = vpop.f32.mrb[0].mxu0
    %1428 = vmatprep.mubr.f32.mxu0 0.0
    %1429 = vmatmul.mubr.f32.gmra.mrb[0].mxu0 %v1357
    %v1430 = vpop.f32.mrb[0].mxu0
    %v1431 = vadd.f32 0.0, %v1430
    %v1432 = vpop.f32.mrb[0].mxu0
    %1433 = vdwg.mxu0
    %1434 = vmatprep.subr.mxu0 0.0
    %1435 = vmatpush1.msra.mxu0 %v1156
    %1436 = vmatprep.subr.mxu0 0.0
    %1437 = vmatpush1.msra.mxu0 %v1158
    %1438 = vmatprep.subr.mxu0 0.0
    %1439 = vmatpush1.msra.mxu0 %v1160
    %1440 = vmatprep.subr.mxu0 0.0
    %1441 = vmatpush1.msra.mxu0 %v1162
    %1442 = vmatprep.subr.mxu0 0.0
    %1443 = vmatpush1.msra.mxu0 %v1164
    %1444 = vmatprep.subr.mxu0 0.0
    %1445 = vmatpush1.msra.mxu0 0.0
    %1446 = vmatprep.subr.mxu0 0.0
    %1447 = vmatpush1.msra.mxu0 0.0
    %1448 = vmatprep.subr.mxu0 0.0
    %1449 = vmatpush1.msra.mxu0 0.0
    %1450 = vmatprep.subr.mxu0 0.0
    %1451 = vmatpush1.msra.mxu0 0.0
    %1452 = vmatprep.subr.mxu0 0.0
    %1453 = vmatpush1.msra.mxu0 0.0
    %1454 = vmatprep.subr.mxu0 0.0
    %1455 = vmatpush1.msra.mxu0 0.0
    %1456 = vmatprep.subr.mxu0 0.0
    %1457 = vmatpush1.msra.mxu0 0.0
    %1458 = vmatprep.subr.mxu0 0.0
    %1459 = vmatpush1.msra.mxu0 0.0
    %1460 = vmatprep.subr.mxu0 0.0
    %1461 = vmatpush1.msra.mxu0 0.0
    %1462 = vmatprep.subr.mxu0 0.0
    %1463 = vmatpush1.msra.mxu0 0.0
    %1464 = vmatprep.subr.mxu0 0.0
    %1465 = vmatpush1.msra.mxu0 0.0
    %1466 = vmatprep.subr.mxu0 0.0
    %1467 = vmatpush1.msra.mxu0 0.0
    %1468 = vmatprep.subr.mxu0 0.0
    %1469 = vmatpush1.msra.mxu0 0.0
    %1470 = vmatprep.subr.mxu0 0.0
    %1471 = vmatpush1.msra.mxu0 0.0
    %1472 = vmatprep.subr.mxu0 0.0
    %1473 = vmatpush1.msra.mxu0 0.0
    %1474 = vmatprep.subr.mxu0 0.0
    %1475 = vmatpush1.msra.mxu0 0.0
    %1476 = vmatprep.subr.mxu0 0.0
    %1477 = vmatpush1.msra.mxu0 0.0
    %1478 = vmatprep.subr.mxu0 0.0
    %1479 = vmatpush1.msra.mxu0 0.0
    %1480 = vmatprep.subr.mxu0 0.0
    %1481 = vmatpush1.msra.mxu0 0.0
    %1482 = vmatprep.subr.mxu0 0.0
    %1483 = vmatpush1.msra.mxu0 0.0
    %1484 = vmatprep.subr.mxu0 0.0
    %1485 = vmatpush1.msra.mxu0 0.0
    %1486 = vmatprep.subr.mxu0 0.0
    %1487 = vmatpush1.msra.mxu0 0.0
    %1488 = vmatprep.subr.mxu0 0.0
    %1489 = vmatpush1.msra.mxu0 0.0
    %1490 = vmatprep.subr.mxu0 0.0
    %1491 = vmatpush1.msra.mxu0 0.0
    %1492 = vmatprep.subr.mxu0 0.0
    %1493 = vmatpush1.msra.mxu0 0.0
    %1494 = vmatprep.subr.mxu0 0.0
    %1495 = vmatpush1.msra.mxu0 0.0
    %1496 = vmatprep.subr.mxu0 0.0
    %1497 = vmatpush1.msra.mxu0 0.0
    %1498 = vmatprep.mubr.f32.mxu0 0.0
    %1499 = vmatmul.mubr.f32.gmra.mrb[0].mxu0 %v1354
    %v1500 = vpop.f32.mrb[0].mxu0
    %v1501 = vadd.f32 1.0, %v1500
    %v1502 = vpop.f32.mrb[0].mxu0
    %1503 = vmatprep.mubr.f32.mxu0 0.0
    %1504 = vmatmul.mubr.f32.gmra.mrb[0].mxu0 %v1357
    %v1505 = vpop.f32.mrb[0].mxu0
    %v1506 = vadd.f32 1.0, %v1505
    %v1507 = vpop.f32.mrb[0].mxu0
    %1508 = vdwg.mxu0
    %v1509 = vrcp.pop %v1501
    %v1510 = vrcp.pop %v1506
    %1512 = vset.pattern.permute.xlu0 0
    %1513 = vperm.xlu0 %1512, %v1509
    %v1514 = vpop.permute.xlu0 %1513
    %1517 = vset.pattern.permute.xlu0 0
    %1518 = vperm.xlu0 %1517, %v1510
    %v1519 = vpop.permute.xlu0 %1518
    %v1521 = vmul.f32 %v1426, %v1514
    %v1522 = vmul.f32 %v1431, %v1519
    %s1523 = scalar_lea.vmem [#allocation2], 128
    %v1524 = vld [vmem:[%s1523] sm:$0xff]
    %v1525 = vld [vmem:[%s1523 + $0x8] sm:$0xff]
    %v1526 = vld [vmem:[%s1523 + $0x10] sm:$0xff]
    %v1527 = vld [vmem:[%s1523 + $0x18] sm:$0xff]
    %v1528 = vld [vmem:[%s1523 + $0x20] sm:$0xff]
    %v1529 = vld [vmem:[%s1523 + $0x28] sm:$0xff]
    %v1530 = vld [vmem:[%s1523 + $0x30] sm:$0xff]
    %v1531 = vld [vmem:[%s1523 + $0x38] sm:$0xff]
    %v1532 = vld [vmem:[%s1523 + $0x40] sm:$0xff]
    %v1533 = vld [vmem:[%s1523 + $0x48] sm:$0xff]
    %v1534 = vld [vmem:[%s1523 + $0x50] sm:$0xff]
    %v1535 = vld [vmem:[%s1523 + $0x58] sm:$0xff]
    %v1536 = vld [vmem:[%s1523 + $0x60] sm:$0xff]
    %v1537 = vld [vmem:[%s1523 + $0x68] sm:$0xff]
    %v1538 = vld [vmem:[%s1523 + $0x70] sm:$0xff]
    %v1539 = vld [vmem:[%s1523 + $0x78] sm:$0xff]
    %1540 = vmatprep.subr.mxu0 0.0
    %1541 = vmatpush1.msra.mxu0 %v1524
    %1542 = vmatprep.subr.mxu0 0.0
    %1543 = vmatpush1.msra.mxu0 %v1525
    %1544 = vmatprep.subr.mxu0 0.0
    %1545 = vmatpush1.msra.mxu0 %v1526
    %1546 = vmatprep.subr.mxu0 0.0
    %1547 = vmatpush1.msra.mxu0 %v1527
    %1548 = vmatprep.subr.mxu0 0.0
    %1549 = vmatpush1.msra.mxu0 %v1528
    %1550 = vmatprep.subr.mxu0 0.0
    %1551 = vmatpush1.msra.mxu0 %v1529
    %1552 = vmatprep.subr.mxu0 0.0
    %1553 = vmatpush1.msra.mxu0 %v1530
    %1554 = vmatprep.subr.mxu0 0.0
    %1555 = vmatpush1.msra.mxu0 %v1531
    %1556 = vmatprep.subr.mxu0 0.0
    %1557 = vmatpush1.msra.mxu0 %v1532
    %1558 = vmatprep.subr.mxu0 0.0
    %1559 = vmatpush1.msra.mxu0 %v1533
    %1560 = vmatprep.subr.mxu0 0.0
    %1561 = vmatpush1.msra.mxu0 %v1534
    %1562 = vmatprep.subr.mxu0 0.0
    %1563 = vmatpush1.msra.mxu0 %v1535
    %1564 = vmatprep.subr.mxu0 0.0
    %1565 = vmatpush1.msra.mxu0 %v1536
    %1566 = vmatprep.subr.mxu0 0.0
    %1567 = vmatpush1.msra.mxu0 %v1537
    %1568 = vmatprep.subr.mxu0 0.0
    %1569 = vmatpush1.msra.mxu0 %v1538
    %1570 = vmatprep.subr.mxu0 0.0
    %1571 = vmatpush1.msra.mxu0 %v1539
    %1572 = vmatprep.subr.mxu0 0.0
    %1573 = vmatpush1.msra.mxu0 0.0
    %1574 = vmatprep.subr.mxu0 0.0
    %1575 = vmatpush1.msra.mxu0 0.0
    %1576 = vmatprep.subr.mxu0 0.0
    %1577 = vmatpush1.msra.mxu0 0.0
    %1578 = vmatprep.subr.mxu0 0.0
    %1579 = vmatpush1.msra.mxu0 0.0
    %1580 = vmatprep.subr.mxu0 0.0
    %1581 = vmatpush1.msra.mxu0 0.0
    %1582 = vmatprep.subr.mxu0 0.0
    %1583 = vmatpush1.msra.mxu0 0.0
    %1584 = vmatprep.subr.mxu0 0.0
    %1585 = vmatpush1.msra.mxu0 0.0
    %1586 = vmatprep.subr.mxu0 0.0
    %1587 = vmatpush1.msra.mxu0 0.0
    %1588 = vmatprep.subr.mxu0 0.0
    %1589 = vmatpush1.msra.mxu0 0.0
    %1590 = vmatprep.subr.mxu0 0.0
    %1591 = vmatpush1.msra.mxu0 0.0
    %1592 = vmatprep.subr.mxu0 0.0
    %1593 = vmatpush1.msra.mxu0 0.0
    %1594 = vmatprep.subr.mxu0 0.0
    %1595 = vmatpush1.msra.mxu0 0.0
    %1596 = vmatprep.subr.mxu0 0.0
    %1597 = vmatpush1.msra.mxu0 0.0
    %1598 = vmatprep.subr.mxu0 0.0
    %1599 = vmatpush1.msra.mxu0 0.0
    %1600 = vmatprep.subr.mxu0 0.0
    %1601 = vmatpush1.msra.mxu0 0.0
    %1602 = vmatprep.subr.mxu0 0.0
    %1603 = vmatpush1.msra.mxu0 0.0
    %1604 = vmatprep.mubr.f32.mxu0 0.0
    %1605 = vmatmul.mubr.f32.gmra.mrb[0].mxu0 %v1521
    %v1606 = vpop.f32.mrb[0].mxu0
    %v1607 = vadd.f32 0.0, %v1606
    %v1608 = vpop.f32.mrb[0].mxu0
    %1609 = vmatprep.mubr.f32.mxu0 0.0
    %1610 = vmatmul.mubr.f32.gmra.mrb[0].mxu0 %v1522
    %v1611 = vpop.f32.mrb[0].mxu0
    %v1612 = vadd.f32 0.0, %v1611
    %v1613 = vpop.f32.mrb[0].mxu0
    %1614 = vdwg.mxu0
    %v1615 = vadd.f32 %v1092, %v1607
    %v1616 = vadd.f32 %v1093, %v1612
    %s1617 = scalar_lea.vmem %s9, 1
    %v1618 = vld [vmem:[%s1617] sm:$0x1]
    %v1620 = vlaneseq
    %v1621 = vshrl.u32 %v1620, 7
    %v1622 = vsub.s32 0, %v1621
    %v1623 = vrot.slane %v1618, %v1622
    %v1625 = vadd.f32 %v1615, %v1623
    %v1626 = vadd.f32 %v1616, %v1623
    %v1627 = vmax.f32 %v1625, 0.0
    %v1628 = vmax.f32 %v1626, 0.0
    %1629 = vmatprep.subr.mxu0 0.0
    %1630 = vmatpush1.msra.mxu0 %v1627
    %1631 = vmatprep.subr.mxu0 0.0
    %1632 = vmatpush1.msra.mxu0 %v1628
    %1633 = vmatprep.subr.mxu0 0.0
    %1634 = vmatpush1.msra.mxu0 0.0
    %1635 = vmatprep.subr.mxu0 0.0
    %1636 = vmatpush1.msra.mxu0 0.0
    %1637 = vmatprep.subr.mxu0 0.0
    %1638 = vmatpush1.msra.mxu0 0.0
    %1639 = vmatprep.subr.mxu0 0.0
    %1640 = vmatpush1.msra.mxu0 0.0
    %1641 = vmatprep.subr.mxu0 0.0
    %1642 = vmatpush1.msra.mxu0 0.0
    %1643 = vmatprep.subr.mxu0 0.0
    %1644 = vmatpush1.msra.mxu0 0.0
    %1645 = vmatprep.subr.mxu0 0.0
    %1646 = vmatpush1.msra.mxu0 0.0
    %1647 = vmatprep.subr.mxu0 0.0
    %1648 = vmatpush1.msra.mxu0 0.0
    %1649 = vmatprep.subr.mxu0 0.0
    %1650 = vmatpush1.msra.mxu0 0.0
    %1651 = vmatprep.subr.mxu0 0.0
    %1652 = vmatpush1.msra.mxu0 0.0
    %1653 = vmatprep.subr.mxu0 0.0
    %1654 = vmatpush1.msra.mxu0 0.0
    %1655 = vmatprep.subr.mxu0 0.0
    %1656 = vmatpush1.msra.mxu0 0.0
    %1657 = vmatprep.subr.mxu0 0.0
    %1658 = vmatpush1.msra.mxu0 0.0
    %1659 = vmatprep.subr.mxu0 0.0
    %1660 = vmatpush1.msra.mxu0 0.0
    %1661 = vmatprep.subr.mxu0 0.0
    %1662 = vmatpush1.msra.mxu0 0.0
    %1663 = vmatprep.subr.mxu0 0.0
    %1664 = vmatpush1.msra.mxu0 0.0
    %1665 = vmatprep.subr.mxu0 0.0
    %1666 = vmatpush1.msra.mxu0 0.0
    %1667 = vmatprep.subr.mxu0 0.0
    %1668 = vmatpush1.msra.mxu0 0.0
    %1669 = vmatprep.subr.mxu0 0.0
    %1670 = vmatpush1.msra.mxu0 0.0
    %1671 = vmatprep.subr.mxu0 0.0
    %1672 = vmatpush1.msra.mxu0 0.0
    %1673 = vmatprep.subr.mxu0 0.0
    %1674 = vmatpush1.msra.mxu0 0.0
    %1675 = vmatprep.subr.mxu0 0.0
    %1676 = vmatpush1.msra.mxu0 0.0
    %1677 = vmatprep.subr.mxu0 0.0
    %1678 = vmatpush1.msra.mxu0 0.0
    %1679 = vmatprep.subr.mxu0 0.0
    %1680 = vmatpush1.msra.mxu0 0.0
    %1681 = vmatprep.subr.mxu0 0.0
    %1682 = vmatpush1.msra.mxu0 0.0
    %1683 = vmatprep.subr.mxu0 0.0
    %1684 = vmatpush1.msra.mxu0 0.0
    %1685 = vmatprep.subr.mxu0 0.0
    %1686 = vmatpush1.msra.mxu0 0.0
    %1687 = vmatprep.subr.mxu0 0.0
    %1688 = vmatpush1.msra.mxu0 0.0
    %1689 = vmatprep.subr.mxu0 0.0
    %1690 = vmatpush1.msra.mxu0 0.0
    %1691 = vmatprep.subr.mxu0 0.0
    %1692 = vmatpush1.msra.mxu0 0.0
    %1693 = vmatprep.mubr.f32.mxu0 0.0
    %1694 = vmatmul.mubr.f32.gmra.mrb[0].mxu0 %v745
    %v1695 = vpop.f32.mrb[0].mxu0
    %v1696 = vadd.f32 0.0, %v1695
    %v1697 = vpop.f32.mrb[0].mxu0
    %1698 = vdwg.mxu0
    %v1699 = vld [vmem:[%s12] sm:$0xff]
    %v1700 = vld [vmem:[%s12 + $0x8] sm:$0xff]
    %v1701 = vld [vmem:[%s12 + $0x10] sm:$0xff]
    %v1702 = vld [vmem:[%s12 + $0x18] sm:$0xff]
    %v1703 = vld [vmem:[%s12 + $0x20] sm:$0xff]
    %v1704 = vld [vmem:[%s12 + $0x28] sm:$0xff]
    %v1705 = vld [vmem:[%s12 + $0x30] sm:$0xff]
    %v1706 = vld [vmem:[%s12 + $0x38] sm:$0xff]
    %v1707 = vld [vmem:[%s12 + $0x40] sm:$0xff]
    %v1708 = vld [vmem:[%s12 + $0x48] sm:$0xff]
    %v1709 = vld [vmem:[%s12 + $0x50] sm:$0xff]
    %v1710 = vld [vmem:[%s12 + $0x58] sm:$0xff]
    %v1711 = vld [vmem:[%s12 + $0x60] sm:$0xff]
    %v1712 = vld [vmem:[%s12 + $0x68] sm:$0xff]
    %v1713 = vld [vmem:[%s12 + $0x70] sm:$0xff]
    %v1714 = vld [vmem:[%s12 + $0x78] sm:$0xff]
    %v1715 = vld [vmem:[%s13] sm:$0x1]
    %1716 = vmatprep.subr.mxu0 0.0
    %1717 = vmatpush1.msra.mxu0 %v1699
    %1718 = vmatprep.subr.mxu0 0.0
    %1719 = vmatpush1.msra.mxu0 %v1700
    %1720 = vmatprep.subr.mxu0 0.0
    %1721 = vmatpush1.msra.mxu0 %v1701
    %1722 = vmatprep.subr.mxu0 0.0
    %1723 = vmatpush1.msra.mxu0 %v1702
    %1724 = vmatprep.subr.mxu0 0.0
    %1725 = vmatpush1.msra.mxu0 %v1703
    %1726 = vmatprep.subr.mxu0 0.0
    %1727 = vmatpush1.msra.mxu0 %v1704
    %1728 = vmatprep.subr.mxu0 0.0
    %1729 = vmatpush1.msra.mxu0 %v1705
    %1730 = vmatprep.subr.mxu0 0.0
    %1731 = vmatpush1.msra.mxu0 %v1706
    %1732 = vmatprep.subr.mxu0 0.0
    %1733 = vmatpush1.msra.mxu0 %v1707
    %1734 = vmatprep.subr.mxu0 0.0
    %1735 = vmatpush1.msra.mxu0 %v1708
    %1736 = vmatprep.subr.mxu0 0.0
    %1737 = vmatpush1.msra.mxu0 %v1709
    %1738 = vmatprep.subr.mxu0 0.0
    %1739 = vmatpush1.msra.mxu0 %v1710
    %1740 = vmatprep.subr.mxu0 0.0
    %1741 = vmatpush1.msra.mxu0 %v1711
    %1742 = vmatprep.subr.mxu0 0.0
    %1743 = vmatpush1.msra.mxu0 %v1712
    %1744 = vmatprep.subr.mxu0 0.0
    %1745 = vmatpush1.msra.mxu0 %v1713
    %1746 = vmatprep.subr.mxu0 0.0
    %1747 = vmatpush1.msra.mxu0 %v1714
    %1748 = vmatprep.subr.mxu0 0.0
    %1749 = vmatpush1.msra.mxu0 0.0
    %1750 = vmatprep.subr.mxu0 0.0
    %1751 = vmatpush1.msra.mxu0 0.0
    %1752 = vmatprep.subr.mxu0 0.0
    %1753 = vmatpush1.msra.mxu0 0.0
    %1754 = vmatprep.subr.mxu0 0.0
    %1755 = vmatpush1.msra.mxu0 0.0
    %1756 = vmatprep.subr.mxu0 0.0
    %1757 = vmatpush1.msra.mxu0 0.0
    %1758 = vmatprep.subr.mxu0 0.0
    %1759 = vmatpush1.msra.mxu0 0.0
    %1760 = vmatprep.subr.mxu0 0.0
    %1761 = vmatpush1.msra.mxu0 0.0
    %1762 = vmatprep.subr.mxu0 0.0
    %1763 = vmatpush1.msra.mxu0 0.0
    %1764 = vmatprep.subr.mxu0 0.0
    %1765 = vmatpush1.msra.mxu0 0.0
    %1766 = vmatprep.subr.mxu0 0.0
    %1767 = vmatpush1.msra.mxu0 0.0
    %1768 = vmatprep.subr.mxu0 0.0
    %1769 = vmatpush1.msra.mxu0 0.0
    %1770 = vmatprep.subr.mxu0 0.0
    %1771 = vmatpush1.msra.mxu0 0.0
    %1772 = vmatprep.subr.mxu0 0.0
    %1773 = vmatpush1.msra.mxu0 0.0
    %1774 = vmatprep.subr.mxu0 0.0
    %1775 = vmatpush1.msra.mxu0 0.0
    %1776 = vmatprep.subr.mxu0 0.0
    %1777 = vmatpush1.msra.mxu0 0.0
    %1778 = vmatprep.subr.mxu0 0.0
    %1779 = vmatpush1.msra.mxu0 0.0
    %1780 = vmatprep.mubr.f32.mxu0 0.0
    %1781 = vmatmul.mubr.f32.gmra.mrb[0].mxu0 %v1696
    %v1782 = vpop.f32.mrb[0].mxu0
    %v1783 = vadd.f32 %v1715, %v1782
    %v1784 = vpop.f32.mrb[0].mxu0
    %1785 = vdwg.mxu0
    %v1786 = vmax.f32 %v1783, 0.0
    %v1787 = vld [vmem:[#allocation5] sm:$0xff]
    %v1788 = vld [vmem:[#allocation5 + $0x8] sm:$0xff]
    %v1789 = vld [vmem:[#allocation5 + $0x10] sm:$0xff]
    %v1790 = vld [vmem:[#allocation5 + $0x18] sm:$0xff]
    %v1791 = vld [vmem:[#allocation5 + $0x20] sm:$0xff]
    %v1792 = vld [vmem:[#allocation5 + $0x28] sm:$0xff]
    %v1793 = vld [vmem:[#allocation5 + $0x30] sm:$0xff]
    %v1794 = vld [vmem:[#allocation5 + $0x38] sm:$0xff]
    %v1795 = vld [vmem:[#allocation5 + $0x40] sm:$0xff]
    %v1796 = vld [vmem:[#allocation5 + $0x48] sm:$0xff]
    %v1797 = vld [vmem:[#allocation5 + $0x50] sm:$0xff]
    %v1798 = vld [vmem:[#allocation5 + $0x58] sm:$0xff]
    %v1799 = vld [vmem:[#allocation5 + $0x60] sm:$0xff]
    %v1800 = vld [vmem:[#allocation5 + $0x68] sm:$0xff]
    %v1801 = vld [vmem:[#allocation5 + $0x70] sm:$0xff]
    %v1802 = vld [vmem:[#allocation5 + $0x78] sm:$0xff]
    %v1803 = vld [vmem:[%s15] sm:$0x1]
    %1804 = vmatprep.subr.mxu0 0.0
    %1805 = vmatpush1.msra.mxu0 %v1787
    %1806 = vmatprep.subr.mxu0 0.0
    %1807 = vmatpush1.msra.mxu0 %v1788
    %1808 = vmatprep.subr.mxu0 0.0
    %1809 = vmatpush1.msra.mxu0 %v1789
    %1810 = vmatprep.subr.mxu0 0.0
    %1811 = vmatpush1.msra.mxu0 %v1790
    %1812 = vmatprep.subr.mxu0 0.0
    %1813 = vmatpush1.msra.mxu0 %v1791
    %1814 = vmatprep.subr.mxu0 0.0
    %1815 = vmatpush1.msra.mxu0 %v1792
    %1816 = vmatprep.subr.mxu0 0.0
    %1817 = vmatpush1.msra.mxu0 %v1793
    %1818 = vmatprep.subr.mxu0 0.0
    %1819 = vmatpush1.msra.mxu0 %v1794
    %1820 = vmatprep.subr.mxu0 0.0
    %1821 = vmatpush1.msra.mxu0 %v1795
    %1822 = vmatprep.subr.mxu0 0.0
    %1823 = vmatpush1.msra.mxu0 %v1796
    %1824 = vmatprep.subr.mxu0 0.0
    %1825 = vmatpush1.msra.mxu0 %v1797
    %1826 = vmatprep.subr.mxu0 0.0
    %1827 = vmatpush1.msra.mxu0 %v1798
    %1828 = vmatprep.subr.mxu0 0.0
    %1829 = vmatpush1.msra.mxu0 %v1799
    %1830 = vmatprep.subr.mxu0 0.0
    %1831 = vmatpush1.msra.mxu0 %v1800
    %1832 = vmatprep.subr.mxu0 0.0
    %1833 = vmatpush1.msra.mxu0 %v1801
    %1834 = vmatprep.subr.mxu0 0.0
    %1835 = vmatpush1.msra.mxu0 %v1802
    %1836 = vmatprep.subr.mxu0 0.0
    %1837 = vmatpush1.msra.mxu0 0.0
    %1838 = vmatprep.subr.mxu0 0.0
    %1839 = vmatpush1.msra.mxu0 0.0
    %1840 = vmatprep.subr.mxu0 0.0
    %1841 = vmatpush1.msra.mxu0 0.0
    %1842 = vmatprep.subr.mxu0 0.0
    %1843 = vmatpush1.msra.mxu0 0.0
    %1844 = vmatprep.subr.mxu0 0.0
    %1845 = vmatpush1.msra.mxu0 0.0
    %1846 = vmatprep.subr.mxu0 0.0
    %1847 = vmatpush1.msra.mxu0 0.0
    %1848 = vmatprep.subr.mxu0 0.0
    %1849 = vmatpush1.msra.mxu0 0.0
    %1850 = vmatprep.subr.mxu0 0.0
    %1851 = vmatpush1.msra.mxu0 0.0
    %1852 = vmatprep.subr.mxu0 0.0
    %1853 = vmatpush1.msra.mxu0 0.0
    %1854 = vmatprep.subr.mxu0 0.0
    %1855 = vmatpush1.msra.mxu0 0.0
    %1856 = vmatprep.subr.mxu0 0.0
    %1857 = vmatpush1.msra.mxu0 0.0
    %1858 = vmatprep.subr.mxu0 0.0
    %1859 = vmatpush1.msra.mxu0 0.0
    %1860 = vmatprep.subr.mxu0 0.0
    %1861 = vmatpush1.msra.mxu0 0.0
    %1862 = vmatprep.subr.mxu0 0.0
    %1863 = vmatpush1.msra.mxu0 0.0
    %1864 = vmatprep.subr.mxu0 0.0
    %1865 = vmatpush1.msra.mxu0 0.0
    %1866 = vmatprep.subr.mxu0 0.0
    %1867 = vmatpush1.msra.mxu0 0.0
    %1868 = vmatprep.mubr.f32.mxu0 0.0
    %1869 = vmatmul.mubr.f32.gmra.mrb[0].mxu0 %v1786
    %v1870 = vpop.f32.mrb[0].mxu0
    %v1871 = vadd.f32 %v1803, %v1870
    %v1872 = vpop.f32.mrb[0].mxu0
    %1873 = vdwg.mxu0
    %s1874 = scalar_lea.vmem [#allocation7], 1
    %1875 = vst [vmem:[%s1874] sm:$0x1] %v1871
    // Predicated region
    $region74: #{tpu_custom_call.1} parent=1 // pred_check
      _
    $region75: #{tpu_custom_call.1} parent=1 // pred_check_branch
      %1877 = sbr.rel (0) target = $region77
    $region76: #{tpu_custom_call.1} parent=1 // pred_region
      %s1879 = ssub.s32 32, 32
      %1880 = vsyncadd [#allocation4], %s1879
      %s1881 = sshll.u32 [#allocation7], 4
      %s1882 = int_to_ptr.vmem [resolvable:$true] %s1881
      %1887 = dma.vmem_to_hbm [thread:$0]  %s1882, 32, %s16, [#allocation4], 16, 16, 1
    $region77: #{tpu_custom_call.1} parent=1 // pred_fallthru
      _
    // Predicated region
    $region78: #{tpu_custom_call.1} parent=1 // pred_check
      _
    $region79: #{tpu_custom_call.1} parent=1 // pred_check_branch
      %1889 = sbr.rel (0) target = $region81
    $region80: #{tpu_custom_call.1} parent=1 // pred_region
      %1890 = dma.done [#allocation4], 32
    $region81: #{tpu_custom_call.1} parent=1 // pred_fallthru
      _
    %1891 = vsyncpa [#allocation3], 1
    %1892 = vsyncpa [#allocation6], 1
    %1893 = vsyncpa [#allocation4], 1

</llo_original>
